<compile_context>
chip_gen: v5e
topology: v5e:2x2
jax: 0.10.0
libtpu: 0.0.40
codegen_flags: <defaults>
</compile_context>

<pallas_src>
from itertools import product

import jax
import jax.numpy as jnp
from jax import lax
from jax.experimental import pallas as pl
from jax.experimental.pallas import tpu as pltpu

OFFSETS = tuple(product((-1, 0, 1), repeat=3))   # 27 periodic-image offsets

NUM_CORES = 2            # leading "parallel" grid axis (2 TCs on v7x; no-op on v5e/v6e)
SUB = 8                  # sublanes per vreg
CHUNK_LANES = 128        # lanes per inner compute chunk -> (8, 128) = 1 vreg / value
MAX_BLOCK_LANES = 1024   # lanes per grid step (DMA block): up to 8192 atoms / step
N_ROWS = 10              # packed slab rows: x(3) | x_tilde(3) | x_traj(3) | struct-id(1)


def _make_kernel(num_structs, n_chunks, euclidian, distance):
    """Build the Pallas kernel body with static config baked in."""

    def kernel(cell_ref, slab_ref, o_ref):
        # o_ref: (8, 128) per-core partial sums, resident across the
        # "arbitrary" atom-block grid axis.
        @pl.when(pl.program_id(1) == 0)
        def _init():
            o_ref[...] = jnp.zeros_like(o_ref)

        # 3x3 cell of every structure lives in SMEM; read the 9*S scalars once
        # per grid step on the (otherwise idle) scalar unit.
        cellv = [[cell_ref[s, e] for e in range(9)] for s in range(num_structs)]

        acc = jnp.zeros((SUB, CHUNK_LANES), jnp.float32)

        # Static (unrolled) chunk loop: each chunk is one (8, 128) vreg of atoms.
        for j in range(n_chunks):
            lane0 = j * CHUNK_LANES

            def row(r, lane0=lane0):
                return slab_ref[r, :, pl.ds(lane0, CHUNK_LANES)]   # (8, 128)

            x = [row(d) for d in range(3)]
            xt = [row(3 + d) for d in range(3)]
            xtraj = [row(6 + d) for d in range(3)]
            sid = row(9)

            # Expand per-structure cell to per-atom values:
            #   cellrow[3c + d] = cell[sid, c, d]
            # TODO(synk): for very large structure batches this mask-select
            # expansion scales O(S) per chunk; a grouped (scalar-prefetch)
            # layout would be preferable there.
            maskf = [(sid == float(s)).astype(jnp.float32)
                     for s in range(num_structs)]
            validf = maskf[0]
            for s in range(1, num_structs):
                validf = validf + maskf[s]          # 1.0 real atom, 0.0 pad slot
            cellrow = []
            for e in range(9):
                v = maskf[0] * cellv[0][e]
                for s in range(1, num_structs):
                    v = v + maskf[s] * cellv[s][e]
                cellrow.append(v)

            # fractional coords wrapped into [0, 1)
            xm = [x[d] - jnp.floor(x[d]) for d in range(3)]
            xtm = [xt[d] - jnp.floor(xt[d]) for d in range(3)]
            diff = [xtm[d] - xm[d] for d in range(3)]            # x_tilde - x
            basev = [xtraj[d] + diff[d] for d in range(3)]       # x_traj + diff

            # d0_c = (cell @ diff)_c  (= trajectory for offset (0,0,0))
            d0 = []
            for c in range(3):
                v = cellrow[3 * c + 0] * diff[0]
                v = v + cellrow[3 * c + 1] * diff[1]
                v = v + cellrow[3 * c + 2] * diff[2]
                d0.append(v)

            # Running min over the 27 periodic images.  Strict '<' preserves
            # torch.argmin first-occurrence tie-breaking.  Offsets in {-1,0,1}
            # => fold (cell @ offset) in as add/sub of cell columns.
            best = None
            sel = None
            for off in OFFSETS:
                nsq = None
                for c in range(3):
                    t = d0[c]
                    for d in range(3):
                        if off[d] == 1:
                            t = t - cellrow[3 * c + d]
                        elif off[d] == -1:
                            t = t + cellrow[3 * c + d]
                    sq = t * t
                    nsq = sq if nsq is None else nsq + sq
                if best is None:
                    best = nsq
                    sel = [jnp.full_like(nsq, float(off[d])) for d in range(3)]
                else:
                    better = nsq < best
                    best = jnp.where(better, nsq, best)
                    sel = [jnp.where(better, float(off[d]), sel[d])
                           for d in range(3)]

            # err = x_traj - optimal_traj ; optimal fractional traj = sel - diff
            if euclidian:
                e3 = [basev[d] - sel[d] for d in range(3)]
                err = []
                for c in range(3):
                    v = cellrow[3 * c + 0] * e3[0]
                    v = v + cellrow[3 * c + 1] * e3[1]
                    v = v + cellrow[3 * c + 2] * e3[2]
                    err.append(v)
            else:
                err = [basev[d] - sel[d] for d in range(3)]

            if distance == "l1":
                pe = [jnp.abs(err[d]) for d in range(3)]
            else:  # "mse"
                pe = [err[d] * err[d] for d in range(3)]

            acc = acc + (pe[0] + pe[1] + pe[2]) * validf   # pad slots masked to 0

        o_ref[...] += acc

    return kernel


def optimal_traj_loss(cell, x, x_tilde, x_traj, num_atoms,
                      euclidian: bool = False, distance: str = "l1"):
    """Pallas implementation of OptimalTrajLoss.forward (scalar loss)."""
    if distance not in ("l1", "mse"):
        raise ValueError(f"unsupported distance: {distance}")

    n = x.shape[0]
    num_structs = cell.shape[0]

    # ---- tiling (all static Python ints) ------------------------------------
    w_min = pl.cdiv(n, SUB)                                   # lanes needed
    lanes_per_core = max(1, pl.cdiv(w_min, NUM_CORES))
    lanes_per_block = min(MAX_BLOCK_LANES,
                          pl.cdiv(lanes_per_core, CHUNK_LANES) * CHUNK_LANES)
    nb_per_core = pl.cdiv(lanes_per_core, lanes_per_block)
    w_pad = NUM_CORES * nb_per_core * lanes_per_block
    n_pad = w_pad * SUB
    n_chunks = lanes_per_block // CHUNK_LANES

    # ---- pack all per-atom data into one lane/sublane-dense f32 slab --------
    sid = jnp.repeat(jnp.arange(num_structs, dtype=jnp.int32), num_atoms,
                     total_repeat_length=n).astype(jnp.float32)
    pad = n_pad - n
    coords = jnp.concatenate(
        [x.T.astype(jnp.float32),
         x_tilde.T.astype(jnp.float32),
         x_traj.T.astype(jnp.float32)], axis=0)               # (9, n)
    coords = jnp.pad(coords, ((0, 0), (0, pad)))
    sid_row = jnp.concatenate(
        [sid, jnp.full((pad,), -1.0, jnp.float32)])[None, :]  # pad slots: id = -1
    slab = jnp.concatenate([coords, sid_row], axis=0)         # (10, n_pad)
    slab = slab.reshape(N_ROWS, SUB, w_pad)                   # (10, 8, W)

    cell_flat = cell.reshape(num_structs, 9).astype(jnp.float32)   # (S, 9) -> SMEM

    kernel = _make_kernel(num_structs, n_chunks, euclidian, distance)

    partials = pl.pallas_call(
        kernel,
        out_shape=jax.ShapeDtypeStruct((SUB, NUM_CORES * CHUNK_LANES), jnp.float32),
        grid_spec=pltpu.PrefetchScalarGridSpec(
            num_scalar_prefetch=0,
            grid=(NUM_CORES, nb_per_core),
            in_specs=[
                pl.BlockSpec(memory_space=pltpu.MemorySpace.SMEM),       # (S, 9) cells
                pl.BlockSpec((N_ROWS, SUB, lanes_per_block),
                             lambda c, i: (0, 0, c * nb_per_core + i)),  # atom slab
            ],
            out_specs=pl.BlockSpec((SUB, CHUNK_LANES), lambda c, i: (0, c)),
        ),
        compiler_params=pltpu.CompilerParams(
            dimension_semantics=("parallel", "arbitrary")),
    )(cell_flat, slab)

    return jnp.sum(partials) / (n * 3)


def _reference_loss(cell, x, x_tilde, x_traj, num_atoms,
                    euclidian=False, distance="l1"):
    """Pure-JAX reference mirroring the PyTorch forward."""
    offsets = jnp.array(OFFSETS, dtype=jnp.float32)
    x = x % 1.0
    xt = x_tilde % 1.0
    n = x.shape[0]
    batch = jnp.repeat(jnp.arange(cell.shape[0]), num_atoms, total_repeat_length=n)
    cb = cell[batch]
    euc_xt = jnp.einsum("icd,id->ic", cb, xt)
    x_off = x[:, None, :] + offsets[None, :, :]
    euc_x = jnp.einsum("icd,ikd->ikc", cb, x_off)
    traj = euc_xt[:, None] - euc_x
    min_idx = jnp.argmin(jnp.linalg.norm(traj, axis=2), axis=1)
    rows = jnp.arange(n)
    if euclidian:
        opt = -traj[rows, min_idx]
        xtr = jnp.einsum("icd,id->ic", cb, x_traj)
    else:
        opt = -(xt - x_off[rows, min_idx])
        xtr = x_traj
    d = xtr - opt
    if distance == "l1":
        return jnp.mean(jnp.abs(d))
    return jnp.mean(d * d)


if __name__ == "__main__":
    key = jax.random.PRNGKey(0)
    k_cell, k_x, k_xt, k_traj = jax.random.split(key, 4)

    num_structs = 3
    num_atoms = jnp.array([3, 5, 4], dtype=jnp.int32)   # total N = 12 atoms
    n_total = 12

    # Well-conditioned unit cells ~ 4 * I + noise
    cell = (4.0 * jnp.eye(3)[None, :, :]
            + 0.1 * jax.random.normal(k_cell, (num_structs, 3, 3))).astype(jnp.float32)
    x = jax.random.uniform(k_x, (n_total, 3), dtype=jnp.float32)
    x_tilde = (x + 0.15 * jax.random.normal(k_xt, (n_total, 3))).astype(jnp.float32)
    x_traj = (0.05 * jax.random.normal(k_traj, (n_total, 3))).astype(jnp.float32)

    for euc, dist in ((False, "l1"), (True, "mse")):
        loss = optimal_traj_loss(cell, x, x_tilde, x_traj, num_atoms,
                                 euclidian=euc, distance=dist)
        loss = jax.block_until_ready(loss)
        ref = _reference_loss(cell, x, x_tilde, x_traj, num_atoms,
                              euclidian=euc, distance=dist)
        assert jnp.allclose(loss, ref, rtol=2e-5, atol=2e-5), (euc, dist, loss, ref)

    print("KERNEL_OK")
</pallas_src>

<mosaic_0001>
module attributes {stable_mosaic.version = 11 : i64} {
  func.func @kernel(%arg0: i32, %arg1: i32, %arg2: memref<3x9xf32, #tpu.memory_space<smem>>, %arg3: memref<10x8x128xf32, #tpu.memory_space<vmem>>, %arg4: memref<8x128xf32, #tpu.memory_space<vmem>>) attributes {dimension_semantics = [#tpu.dimension_semantics<parallel>, #tpu.dimension_semantics<arbitrary>], iteration_bounds = array<i64: 2, 1>, scalar_prefetch = 0 : i64, scratch_operands = 0 : i64, tpu.core_type = #tpu.core_type<tc>, window_params = [{transform_indices = @transform_0, window_bounds = array<i64: 3, 9>}, {transform_indices = @transform_1, window_bounds = array<i64: 10, 8, 128>}, {transform_indices = @transform_2, window_bounds = array<i64: 8, 128>}]} {
    %c0_i32 = arith.constant 0 : i32
    %0 = arith.cmpi eq, %arg1, %c0_i32 : i32
    %1 = arith.extui %0 : i1 to i32
    %c0_i32_0 = arith.constant 0 : i32
    %2 = arith.cmpi ne, %1, %c0_i32_0 : i32
    scf.if %2 {
      %cst_163 = arith.constant 0.000000e+00 : f32
      %690 = vector.broadcast %cst_163 : f32 to vector<8x128xf32>
      %c0_164 = arith.constant 0 : index
      %c0_165 = arith.constant 0 : index
      %691 = vector.load %arg4[%c0_164, %c0_165] : memref<8x128xf32, #tpu.memory_space<vmem>>, vector<8x128xf32>
      tpu.vector_store %arg4[%c0_164, %c0_165], %690 {strides = array<i32>} : memref<8x128xf32, #tpu.memory_space<vmem>>, vector<8x128xf32>,
    } else {
    }
    %c0 = arith.constant 0 : index
    %c0_1 = arith.constant 0 : index
    %3 = memref.load %arg2[%c0, %c0_1] : memref<3x9xf32, #tpu.memory_space<smem>>
    %c0_2 = arith.constant 0 : index
    %c1 = arith.constant 1 : index
    %4 = memref.load %arg2[%c0_2, %c1] : memref<3x9xf32, #tpu.memory_space<smem>>
    %c0_3 = arith.constant 0 : index
    %c2 = arith.constant 2 : index
    %5 = memref.load %arg2[%c0_3, %c2] : memref<3x9xf32, #tpu.memory_space<smem>>
    %c0_4 = arith.constant 0 : index
    %c3 = arith.constant 3 : index
    %6 = memref.load %arg2[%c0_4, %c3] : memref<3x9xf32, #tpu.memory_space<smem>>
    %c0_5 = arith.constant 0 : index
    %c4 = arith.constant 4 : index
    %7 = memref.load %arg2[%c0_5, %c4] : memref<3x9xf32, #tpu.memory_space<smem>>
    %c0_6 = arith.constant 0 : index
    %c5 = arith.constant 5 : index
    %8 = memref.load %arg2[%c0_6, %c5] : memref<3x9xf32, #tpu.memory_space<smem>>
    %c0_7 = arith.constant 0 : index
    %c6 = arith.constant 6 : index
    %9 = memref.load %arg2[%c0_7, %c6] : memref<3x9xf32, #tpu.memory_space<smem>>
    %c0_8 = arith.constant 0 : index
    %c7 = arith.constant 7 : index
    %10 = memref.load %arg2[%c0_8, %c7] : memref<3x9xf32, #tpu.memory_space<smem>>
    %c0_9 = arith.constant 0 : index
    %c8 = arith.constant 8 : index
    %11 = memref.load %arg2[%c0_9, %c8] : memref<3x9xf32, #tpu.memory_space<smem>>
    %c1_10 = arith.constant 1 : index
    %c0_11 = arith.constant 0 : index
    %12 = memref.load %arg2[%c1_10, %c0_11] : memref<3x9xf32, #tpu.memory_space<smem>>
    %c1_12 = arith.constant 1 : index
    %c1_13 = arith.constant 1 : index
    %13 = memref.load %arg2[%c1_12, %c1_13] : memref<3x9xf32, #tpu.memory_space<smem>>
    %c1_14 = arith.constant 1 : index
    %c2_15 = arith.constant 2 : index
    %14 = memref.load %arg2[%c1_14, %c2_15] : memref<3x9xf32, #tpu.memory_space<smem>>
    %c1_16 = arith.constant 1 : index
    %c3_17 = arith.constant 3 : index
    %15 = memref.load %arg2[%c1_16, %c3_17] : memref<3x9xf32, #tpu.memory_space<smem>>
    %c1_18 = arith.constant 1 : index
    %c4_19 = arith.constant 4 : index
    %16 = memref.load %arg2[%c1_18, %c4_19] : memref<3x9xf32, #tpu.memory_space<smem>>
    %c1_20 = arith.constant 1 : index
    %c5_21 = arith.constant 5 : index
    %17 = memref.load %arg2[%c1_20, %c5_21] : memref<3x9xf32, #tpu.memory_space<smem>>
    %c1_22 = arith.constant 1 : index
    %c6_23 = arith.constant 6 : index
    %18 = memref.load %arg2[%c1_22, %c6_23] : memref<3x9xf32, #tpu.memory_space<smem>>
    %c1_24 = arith.constant 1 : index
    %c7_25 = arith.constant 7 : index
    %19 = memref.load %arg2[%c1_24, %c7_25] : memref<3x9xf32, #tpu.memory_space<smem>>
    %c1_26 = arith.constant 1 : index
    %c8_27 = arith.constant 8 : index
    %20 = memref.load %arg2[%c1_26, %c8_27] : memref<3x9xf32, #tpu.memory_space<smem>>
    %c2_28 = arith.constant 2 : index
    %c0_29 = arith.constant 0 : index
    %21 = memref.load %arg2[%c2_28, %c0_29] : memref<3x9xf32, #tpu.memory_space<smem>>
    %c2_30 = arith.constant 2 : index
    %c1_31 = arith.constant 1 : index
    %22 = memref.load %arg2[%c2_30, %c1_31] : memref<3x9xf32, #tpu.memory_space<smem>>
    %c2_32 = arith.constant 2 : index
    %c2_33 = arith.constant 2 : index
    %23 = memref.load %arg2[%c2_32, %c2_33] : memref<3x9xf32, #tpu.memory_space<smem>>
    %c2_34 = arith.constant 2 : index
    %c3_35 = arith.constant 3 : index
    %24 = memref.load %arg2[%c2_34, %c3_35] : memref<3x9xf32, #tpu.memory_space<smem>>
    %c2_36 = arith.constant 2 : index
    %c4_37 = arith.constant 4 : index
    %25 = memref.load %arg2[%c2_36, %c4_37] : memref<3x9xf32, #tpu.memory_space<smem>>
    %c2_38 = arith.constant 2 : index
    %c5_39 = arith.constant 5 : index
    %26 = memref.load %arg2[%c2_38, %c5_39] : memref<3x9xf32, #tpu.memory_space<smem>>
    %c2_40 = arith.constant 2 : index
    %c6_41 = arith.constant 6 : index
    %27 = memref.load %arg2[%c2_40, %c6_41] : memref<3x9xf32, #tpu.memory_space<smem>>
    %c2_42 = arith.constant 2 : index
    %c7_43 = arith.constant 7 : index
    %28 = memref.load %arg2[%c2_42, %c7_43] : memref<3x9xf32, #tpu.memory_space<smem>>
    %c2_44 = arith.constant 2 : index
    %c8_45 = arith.constant 8 : index
    %29 = memref.load %arg2[%c2_44, %c8_45] : memref<3x9xf32, #tpu.memory_space<smem>>
    %cst = arith.constant 0.000000e+00 : f32
    %30 = vector.broadcast %cst : f32 to vector<8x128xf32>
    %c0_46 = arith.constant 0 : index
    %c0_47 = arith.constant 0 : index
    %c0_48 = arith.constant 0 : index
    %31 = vector.load %arg3[%c0_46, %c0_47, %c0_48] : memref<10x8x128xf32, #tpu.memory_space<vmem>>, vector<1x8x128xf32>
    %32 = vector.shape_cast %31 : vector<1x8x128xf32> to vector<8x128xf32>
    %c1_49 = arith.constant 1 : index
    %c0_50 = arith.constant 0 : index
    %c0_51 = arith.constant 0 : index
    %33 = vector.load %arg3[%c1_49, %c0_50, %c0_51] : memref<10x8x128xf32, #tpu.memory_space<vmem>>, vector<1x8x128xf32>
    %34 = vector.shape_cast %33 : vector<1x8x128xf32> to vector<8x128xf32>
    %c2_52 = arith.constant 2 : index
    %c0_53 = arith.constant 0 : index
    %c0_54 = arith.constant 0 : index
    %35 = vector.load %arg3[%c2_52, %c0_53, %c0_54] : memref<10x8x128xf32, #tpu.memory_space<vmem>>, vector<1x8x128xf32>
    %36 = vector.shape_cast %35 : vector<1x8x128xf32> to vector<8x128xf32>
    %c3_55 = arith.constant 3 : index
    %c0_56 = arith.constant 0 : index
    %c0_57 = arith.constant 0 : index
    %37 = vector.load %arg3[%c3_55, %c0_56, %c0_57] : memref<10x8x128xf32, #tpu.memory_space<vmem>>, vector<1x8x128xf32>
    %38 = vector.shape_cast %37 : vector<1x8x128xf32> to vector<8x128xf32>
    %c4_58 = arith.constant 4 : index
    %c0_59 = arith.constant 0 : index
    %c0_60 = arith.constant 0 : index
    %39 = vector.load %arg3[%c4_58, %c0_59, %c0_60] : memref<10x8x128xf32, #tpu.memory_space<vmem>>, vector<1x8x128xf32>
    %40 = vector.shape_cast %39 : vector<1x8x128xf32> to vector<8x128xf32>
    %c5_61 = arith.constant 5 : index
    %c0_62 = arith.constant 0 : index
    %c0_63 = arith.constant 0 : index
    %41 = vector.load %arg3[%c5_61, %c0_62, %c0_63] : memref<10x8x128xf32, #tpu.memory_space<vmem>>, vector<1x8x128xf32>
    %42 = vector.shape_cast %41 : vector<1x8x128xf32> to vector<8x128xf32>
    %c6_64 = arith.constant 6 : index
    %c0_65 = arith.constant 0 : index
    %c0_66 = arith.constant 0 : index
    %43 = vector.load %arg3[%c6_64, %c0_65, %c0_66] : memref<10x8x128xf32, #tpu.memory_space<vmem>>, vector<1x8x128xf32>
    %44 = vector.shape_cast %43 : vector<1x8x128xf32> to vector<8x128xf32>
    %c7_67 = arith.constant 7 : index
    %c0_68 = arith.constant 0 : index
    %c0_69 = arith.constant 0 : index
    %45 = vector.load %arg3[%c7_67, %c0_68, %c0_69] : memref<10x8x128xf32, #tpu.memory_space<vmem>>, vector<1x8x128xf32>
    %46 = vector.shape_cast %45 : vector<1x8x128xf32> to vector<8x128xf32>
    %c8_70 = arith.constant 8 : index
    %c0_71 = arith.constant 0 : index
    %c0_72 = arith.constant 0 : index
    %47 = vector.load %arg3[%c8_70, %c0_71, %c0_72] : memref<10x8x128xf32, #tpu.memory_space<vmem>>, vector<1x8x128xf32>
    %48 = vector.shape_cast %47 : vector<1x8x128xf32> to vector<8x128xf32>
    %c9 = arith.constant 9 : index
    %c0_73 = arith.constant 0 : index
    %c0_74 = arith.constant 0 : index
    %49 = vector.load %arg3[%c9, %c0_73, %c0_74] : memref<10x8x128xf32, #tpu.memory_space<vmem>>, vector<1x8x128xf32>
    %50 = vector.shape_cast %49 : vector<1x8x128xf32> to vector<8x128xf32>
    %cst_75 = arith.constant 0.000000e+00 : f32
    %51 = vector.broadcast %cst_75 : f32 to vector<8x128xf32>
    %52 = arith.cmpf oeq, %50, %51 : vector<8x128xf32>
    %53 = arith.extui %52 : vector<8x128xi1> to vector<8x128xi32>
    %54 = arith.sitofp %53 : vector<8x128xi32> to vector<8x128xf32>
    %cst_76 = arith.constant 1.000000e+00 : f32
    %55 = vector.broadcast %cst_76 : f32 to vector<8x128xf32>
    %56 = arith.cmpf oeq, %50, %55 : vector<8x128xf32>
    %57 = arith.extui %56 : vector<8x128xi1> to vector<8x128xi32>
    %58 = arith.sitofp %57 : vector<8x128xi32> to vector<8x128xf32>
    %cst_77 = arith.constant 2.000000e+00 : f32
    %59 = vector.broadcast %cst_77 : f32 to vector<8x128xf32>
    %60 = arith.cmpf oeq, %50, %59 : vector<8x128xf32>
    %61 = arith.extui %60 : vector<8x128xi1> to vector<8x128xi32>
    %62 = arith.sitofp %61 : vector<8x128xi32> to vector<8x128xf32>
    %63 = arith.addf %54, %58 : vector<8x128xf32>
    %64 = arith.addf %63, %62 : vector<8x128xf32>
    %65 = vector.broadcast %3 : f32 to vector<8x128xf32>
    %66 = arith.mulf %54, %65 : vector<8x128xf32>
    %67 = vector.broadcast %12 : f32 to vector<8x128xf32>
    %68 = arith.mulf %58, %67 : vector<8x128xf32>
    %69 = arith.addf %66, %68 : vector<8x128xf32>
    %70 = vector.broadcast %21 : f32 to vector<8x128xf32>
    %71 = arith.mulf %62, %70 : vector<8x128xf32>
    %72 = arith.addf %69, %71 : vector<8x128xf32>
    %73 = vector.broadcast %4 : f32 to vector<8x128xf32>
    %74 = arith.mulf %54, %73 : vector<8x128xf32>
    %75 = vector.broadcast %13 : f32 to vector<8x128xf32>
    %76 = arith.mulf %58, %75 : vector<8x128xf32>
    %77 = arith.addf %74, %76 : vector<8x128xf32>
    %78 = vector.broadcast %22 : f32 to vector<8x128xf32>
    %79 = arith.mulf %62, %78 : vector<8x128xf32>
    %80 = arith.addf %77, %79 : vector<8x128xf32>
    %81 = vector.broadcast %5 : f32 to vector<8x128xf32>
    %82 = arith.mulf %54, %81 : vector<8x128xf32>
    %83 = vector.broadcast %14 : f32 to vector<8x128xf32>
    %84 = arith.mulf %58, %83 : vector<8x128xf32>
    %85 = arith.addf %82, %84 : vector<8x128xf32>
    %86 = vector.broadcast %23 : f32 to vector<8x128xf32>
    %87 = arith.mulf %62, %86 : vector<8x128xf32>
    %88 = arith.addf %85, %87 : vector<8x128xf32>
    %89 = vector.broadcast %6 : f32 to vector<8x128xf32>
    %90 = arith.mulf %54, %89 : vector<8x128xf32>
    %91 = vector.broadcast %15 : f32 to vector<8x128xf32>
    %92 = arith.mulf %58, %91 : vector<8x128xf32>
    %93 = arith.addf %90, %92 : vector<8x128xf32>
    %94 = vector.broadcast %24 : f32 to vector<8x128xf32>
    %95 = arith.mulf %62, %94 : vector<8x128xf32>
    %96 = arith.addf %93, %95 : vector<8x128xf32>
    %97 = vector.broadcast %7 : f32 to vector<8x128xf32>
    %98 = arith.mulf %54, %97 : vector<8x128xf32>
    %99 = vector.broadcast %16 : f32 to vector<8x128xf32>
    %100 = arith.mulf %58, %99 : vector<8x128xf32>
    %101 = arith.addf %98, %100 : vector<8x128xf32>
    %102 = vector.broadcast %25 : f32 to vector<8x128xf32>
    %103 = arith.mulf %62, %102 : vector<8x128xf32>
    %104 = arith.addf %101, %103 : vector<8x128xf32>
    %105 = vector.broadcast %8 : f32 to vector<8x128xf32>
    %106 = arith.mulf %54, %105 : vector<8x128xf32>
    %107 = vector.broadcast %17 : f32 to vector<8x128xf32>
    %108 = arith.mulf %58, %107 : vector<8x128xf32>
    %109 = arith.addf %106, %108 : vector<8x128xf32>
    %110 = vector.broadcast %26 : f32 to vector<8x128xf32>
    %111 = arith.mulf %62, %110 : vector<8x128xf32>
    %112 = arith.addf %109, %111 : vector<8x128xf32>
    %113 = vector.broadcast %9 : f32 to vector<8x128xf32>
    %114 = arith.mulf %54, %113 : vector<8x128xf32>
    %115 = vector.broadcast %18 : f32 to vector<8x128xf32>
    %116 = arith.mulf %58, %115 : vector<8x128xf32>
    %117 = arith.addf %114, %116 : vector<8x128xf32>
    %118 = vector.broadcast %27 : f32 to vector<8x128xf32>
    %119 = arith.mulf %62, %118 : vector<8x128xf32>
    %120 = arith.addf %117, %119 : vector<8x128xf32>
    %121 = vector.broadcast %10 : f32 to vector<8x128xf32>
    %122 = arith.mulf %54, %121 : vector<8x128xf32>
    %123 = vector.broadcast %19 : f32 to vector<8x128xf32>
    %124 = arith.mulf %58, %123 : vector<8x128xf32>
    %125 = arith.addf %122, %124 : vector<8x128xf32>
    %126 = vector.broadcast %28 : f32 to vector<8x128xf32>
    %127 = arith.mulf %62, %126 : vector<8x128xf32>
    %128 = arith.addf %125, %127 : vector<8x128xf32>
    %129 = vector.broadcast %11 : f32 to vector<8x128xf32>
    %130 = arith.mulf %54, %129 : vector<8x128xf32>
    %131 = vector.broadcast %20 : f32 to vector<8x128xf32>
    %132 = arith.mulf %58, %131 : vector<8x128xf32>
    %133 = arith.addf %130, %132 : vector<8x128xf32>
    %134 = vector.broadcast %29 : f32 to vector<8x128xf32>
    %135 = arith.mulf %62, %134 : vector<8x128xf32>
    %136 = arith.addf %133, %135 : vector<8x128xf32>
    %137 = math.floor %32 : vector<8x128xf32>
    %138 = arith.subf %32, %137 : vector<8x128xf32>
    %139 = math.floor %34 : vector<8x128xf32>
    %140 = arith.subf %34, %139 : vector<8x128xf32>
    %141 = math.floor %36 : vector<8x128xf32>
    %142 = arith.subf %36, %141 : vector<8x128xf32>
    %143 = math.floor %38 : vector<8x128xf32>
    %144 = arith.subf %38, %143 : vector<8x128xf32>
    %145 = math.floor %40 : vector<8x128xf32>
    %146 = arith.subf %40, %145 : vector<8x128xf32>
    %147 = math.floor %42 : vector<8x128xf32>
    %148 = arith.subf %42, %147 : vector<8x128xf32>
    %149 = arith.subf %144, %138 : vector<8x128xf32>
    %150 = arith.subf %146, %140 : vector<8x128xf32>
    %151 = arith.subf %148, %142 : vector<8x128xf32>
    %152 = arith.addf %44, %149 : vector<8x128xf32>
    %153 = arith.addf %46, %150 : vector<8x128xf32>
    %154 = arith.addf %48, %151 : vector<8x128xf32>
    %155 = arith.mulf %72, %149 : vector<8x128xf32>
    %156 = arith.mulf %80, %150 : vector<8x128xf32>
    %157 = arith.addf %155, %156 : vector<8x128xf32>
    %158 = arith.mulf %88, %151 : vector<8x128xf32>
    %159 = arith.addf %157, %158 : vector<8x128xf32>
    %160 = arith.mulf %96, %149 : vector<8x128xf32>
    %161 = arith.mulf %104, %150 : vector<8x128xf32>
    %162 = arith.addf %160, %161 : vector<8x128xf32>
    %163 = arith.mulf %112, %151 : vector<8x128xf32>
    %164 = arith.addf %162, %163 : vector<8x128xf32>
    %165 = arith.mulf %120, %149 : vector<8x128xf32>
    %166 = arith.mulf %128, %150 : vector<8x128xf32>
    %167 = arith.addf %165, %166 : vector<8x128xf32>
    %168 = arith.mulf %136, %151 : vector<8x128xf32>
    %169 = arith.addf %167, %168 : vector<8x128xf32>
    %170 = arith.addf %159, %72 : vector<8x128xf32>
    %171 = arith.addf %170, %80 : vector<8x128xf32>
    %172 = arith.addf %171, %88 : vector<8x128xf32>
    %173 = arith.mulf %172, %172 : vector<8x128xf32>
    %174 = arith.addf %164, %96 : vector<8x128xf32>
    %175 = arith.addf %174, %104 : vector<8x128xf32>
    %176 = arith.addf %175, %112 : vector<8x128xf32>
    %177 = arith.mulf %176, %176 : vector<8x128xf32>
    %178 = arith.addf %173, %177 : vector<8x128xf32>
    %179 = arith.addf %169, %120 : vector<8x128xf32>
    %180 = arith.addf %179, %128 : vector<8x128xf32>
    %181 = arith.addf %180, %136 : vector<8x128xf32>
    %182 = arith.mulf %181, %181 : vector<8x128xf32>
    %183 = arith.addf %178, %182 : vector<8x128xf32>
    %cst_78 = arith.constant -1.000000e+00 : f32
    %184 = vector.broadcast %cst_78 : f32 to vector<8x128xf32>
    %cst_79 = arith.constant -1.000000e+00 : f32
    %185 = vector.broadcast %cst_79 : f32 to vector<8x128xf32>
    %cst_80 = arith.constant -1.000000e+00 : f32
    %186 = vector.broadcast %cst_80 : f32 to vector<8x128xf32>
    %187 = arith.addf %159, %72 : vector<8x128xf32>
    %188 = arith.addf %187, %80 : vector<8x128xf32>
    %189 = arith.mulf %188, %188 : vector<8x128xf32>
    %190 = arith.addf %164, %96 : vector<8x128xf32>
    %191 = arith.addf %190, %104 : vector<8x128xf32>
    %192 = arith.mulf %191, %191 : vector<8x128xf32>
    %193 = arith.addf %189, %192 : vector<8x128xf32>
    %194 = arith.addf %169, %120 : vector<8x128xf32>
    %195 = arith.addf %194, %128 : vector<8x128xf32>
    %196 = arith.mulf %195, %195 : vector<8x128xf32>
    %197 = arith.addf %193, %196 : vector<8x128xf32>
    %198 = arith.cmpf olt, %197, %183 : vector<8x128xf32>
    %199 = arith.select %198, %197, %183 : vector<8x128xi1>, vector<8x128xf32>
    %cst_81 = arith.constant -1.000000e+00 : f32
    %200 = vector.broadcast %cst_81 : f32 to vector<8x128xf32>
    %201 = arith.select %198, %200, %184 : vector<8x128xi1>, vector<8x128xf32>
    %cst_82 = arith.constant -1.000000e+00 : f32
    %202 = vector.broadcast %cst_82 : f32 to vector<8x128xf32>
    %203 = arith.select %198, %202, %185 : vector<8x128xi1>, vector<8x128xf32>
    %cst_83 = arith.constant 0.000000e+00 : f32
    %204 = vector.broadcast %cst_83 : f32 to vector<8x128xf32>
    %205 = arith.select %198, %204, %186 : vector<8x128xi1>, vector<8x128xf32>
    %206 = arith.addf %159, %72 : vector<8x128xf32>
    %207 = arith.addf %206, %80 : vector<8x128xf32>
    %208 = arith.subf %207, %88 : vector<8x128xf32>
    %209 = arith.mulf %208, %208 : vector<8x128xf32>
    %210 = arith.addf %164, %96 : vector<8x128xf32>
    %211 = arith.addf %210, %104 : vector<8x128xf32>
    %212 = arith.subf %211, %112 : vector<8x128xf32>
    %213 = arith.mulf %212, %212 : vector<8x128xf32>
    %214 = arith.addf %209, %213 : vector<8x128xf32>
    %215 = arith.addf %169, %120 : vector<8x128xf32>
    %216 = arith.addf %215, %128 : vector<8x128xf32>
    %217 = arith.subf %216, %136 : vector<8x128xf32>
    %218 = arith.mulf %217, %217 : vector<8x128xf32>
    %219 = arith.addf %214, %218 : vector<8x128xf32>
    %220 = arith.cmpf olt, %219, %199 : vector<8x128xf32>
    %221 = arith.select %220, %219, %199 : vector<8x128xi1>, vector<8x128xf32>
    %cst_84 = arith.constant -1.000000e+00 : f32
    %222 = vector.broadcast %cst_84 : f32 to vector<8x128xf32>
    %223 = arith.select %220, %222, %201 : vector<8x128xi1>, vector<8x128xf32>
    %cst_85 = arith.constant -1.000000e+00 : f32
    %224 = vector.broadcast %cst_85 : f32 to vector<8x128xf32>
    %225 = arith.select %220, %224, %203 : vector<8x128xi1>, vector<8x128xf32>
    %cst_86 = arith.constant 1.000000e+00 : f32
    %226 = vector.broadcast %cst_86 : f32 to vector<8x128xf32>
    %227 = arith.select %220, %226, %205 : vector<8x128xi1>, vector<8x128xf32>
    %228 = arith.addf %159, %72 : vector<8x128xf32>
    %229 = arith.addf %228, %88 : vector<8x128xf32>
    %230 = arith.mulf %229, %229 : vector<8x128xf32>
    %231 = arith.addf %164, %96 : vector<8x128xf32>
    %232 = arith.addf %231, %112 : vector<8x128xf32>
    %233 = arith.mulf %232, %232 : vector<8x128xf32>
    %234 = arith.addf %230, %233 : vector<8x128xf32>
    %235 = arith.addf %169, %120 : vector<8x128xf32>
    %236 = arith.addf %235, %136 : vector<8x128xf32>
    %237 = arith.mulf %236, %236 : vector<8x128xf32>
    %238 = arith.addf %234, %237 : vector<8x128xf32>
    %239 = arith.cmpf olt, %238, %221 : vector<8x128xf32>
    %240 = arith.select %239, %238, %221 : vector<8x128xi1>, vector<8x128xf32>
    %cst_87 = arith.constant -1.000000e+00 : f32
    %241 = vector.broadcast %cst_87 : f32 to vector<8x128xf32>
    %242 = arith.select %239, %241, %223 : vector<8x128xi1>, vector<8x128xf32>
    %cst_88 = arith.constant 0.000000e+00 : f32
    %243 = vector.broadcast %cst_88 : f32 to vector<8x128xf32>
    %244 = arith.select %239, %243, %225 : vector<8x128xi1>, vector<8x128xf32>
    %cst_89 = arith.constant -1.000000e+00 : f32
    %245 = vector.broadcast %cst_89 : f32 to vector<8x128xf32>
    %246 = arith.select %239, %245, %227 : vector<8x128xi1>, vector<8x128xf32>
    %247 = arith.addf %159, %72 : vector<8x128xf32>
    %248 = arith.mulf %247, %247 : vector<8x128xf32>
    %249 = arith.addf %164, %96 : vector<8x128xf32>
    %250 = arith.mulf %249, %249 : vector<8x128xf32>
    %251 = arith.addf %248, %250 : vector<8x128xf32>
    %252 = arith.addf %169, %120 : vector<8x128xf32>
    %253 = arith.mulf %252, %252 : vector<8x128xf32>
    %254 = arith.addf %251, %253 : vector<8x128xf32>
    %255 = arith.cmpf olt, %254, %240 : vector<8x128xf32>
    %256 = arith.select %255, %254, %240 : vector<8x128xi1>, vector<8x128xf32>
    %cst_90 = arith.constant -1.000000e+00 : f32
    %257 = vector.broadcast %cst_90 : f32 to vector<8x128xf32>
    %258 = arith.select %255, %257, %242 : vector<8x128xi1>, vector<8x128xf32>
    %cst_91 = arith.constant 0.000000e+00 : f32
    %259 = vector.broadcast %cst_91 : f32 to vector<8x128xf32>
    %260 = arith.select %255, %259, %244 : vector<8x128xi1>, vector<8x128xf32>
    %cst_92 = arith.constant 0.000000e+00 : f32
    %261 = vector.broadcast %cst_92 : f32 to vector<8x128xf32>
    %262 = arith.select %255, %261, %246 : vector<8x128xi1>, vector<8x128xf32>
    %263 = arith.addf %159, %72 : vector<8x128xf32>
    %264 = arith.subf %263, %88 : vector<8x128xf32>
    %265 = arith.mulf %264, %264 : vector<8x128xf32>
    %266 = arith.addf %164, %96 : vector<8x128xf32>
    %267 = arith.subf %266, %112 : vector<8x128xf32>
    %268 = arith.mulf %267, %267 : vector<8x128xf32>
    %269 = arith.addf %265, %268 : vector<8x128xf32>
    %270 = arith.addf %169, %120 : vector<8x128xf32>
    %271 = arith.subf %270, %136 : vector<8x128xf32>
    %272 = arith.mulf %271, %271 : vector<8x128xf32>
    %273 = arith.addf %269, %272 : vector<8x128xf32>
    %274 = arith.cmpf olt, %273, %256 : vector<8x128xf32>
    %275 = arith.select %274, %273, %256 : vector<8x128xi1>, vector<8x128xf32>
    %cst_93 = arith.constant -1.000000e+00 : f32
    %276 = vector.broadcast %cst_93 : f32 to vector<8x128xf32>
    %277 = arith.select %274, %276, %258 : vector<8x128xi1>, vector<8x128xf32>
    %cst_94 = arith.constant 0.000000e+00 : f32
    %278 = vector.broadcast %cst_94 : f32 to vector<8x128xf32>
    %279 = arith.select %274, %278, %260 : vector<8x128xi1>, vector<8x128xf32>
    %cst_95 = arith.constant 1.000000e+00 : f32
    %280 = vector.broadcast %cst_95 : f32 to vector<8x128xf32>
    %281 = arith.select %274, %280, %262 : vector<8x128xi1>, vector<8x128xf32>
    %282 = arith.addf %159, %72 : vector<8x128xf32>
    %283 = arith.subf %282, %80 : vector<8x128xf32>
    %284 = arith.addf %283, %88 : vector<8x128xf32>
    %285 = arith.mulf %284, %284 : vector<8x128xf32>
    %286 = arith.addf %164, %96 : vector<8x128xf32>
    %287 = arith.subf %286, %104 : vector<8x128xf32>
    %288 = arith.addf %287, %112 : vector<8x128xf32>
    %289 = arith.mulf %288, %288 : vector<8x128xf32>
    %290 = arith.addf %285, %289 : vector<8x128xf32>
    %291 = arith.addf %169, %120 : vector<8x128xf32>
    %292 = arith.subf %291, %128 : vector<8x128xf32>
    %293 = arith.addf %292, %136 : vector<8x128xf32>
    %294 = arith.mulf %293, %293 : vector<8x128xf32>
    %295 = arith.addf %290, %294 : vector<8x128xf32>
    %296 = arith.cmpf olt, %295, %275 : vector<8x128xf32>
    %297 = arith.select %296, %295, %275 : vector<8x128xi1>, vector<8x128xf32>
    %cst_96 = arith.constant -1.000000e+00 : f32
    %298 = vector.broadcast %cst_96 : f32 to vector<8x128xf32>
    %299 = arith.select %296, %298, %277 : vector<8x128xi1>, vector<8x128xf32>
    %cst_97 = arith.constant 1.000000e+00 : f32
    %300 = vector.broadcast %cst_97 : f32 to vector<8x128xf32>
    %301 = arith.select %296, %300, %279 : vector<8x128xi1>, vector<8x128xf32>
    %cst_98 = arith.constant -1.000000e+00 : f32
    %302 = vector.broadcast %cst_98 : f32 to vector<8x128xf32>
    %303 = arith.select %296, %302, %281 : vector<8x128xi1>, vector<8x128xf32>
    %304 = arith.addf %159, %72 : vector<8x128xf32>
    %305 = arith.subf %304, %80 : vector<8x128xf32>
    %306 = arith.mulf %305, %305 : vector<8x128xf32>
    %307 = arith.addf %164, %96 : vector<8x128xf32>
    %308 = arith.subf %307, %104 : vector<8x128xf32>
    %309 = arith.mulf %308, %308 : vector<8x128xf32>
    %310 = arith.addf %306, %309 : vector<8x128xf32>
    %311 = arith.addf %169, %120 : vector<8x128xf32>
    %312 = arith.subf %311, %128 : vector<8x128xf32>
    %313 = arith.mulf %312, %312 : vector<8x128xf32>
    %314 = arith.addf %310, %313 : vector<8x128xf32>
    %315 = arith.cmpf olt, %314, %297 : vector<8x128xf32>
    %316 = arith.select %315, %314, %297 : vector<8x128xi1>, vector<8x128xf32>
    %cst_99 = arith.constant -1.000000e+00 : f32
    %317 = vector.broadcast %cst_99 : f32 to vector<8x128xf32>
    %318 = arith.select %315, %317, %299 : vector<8x128xi1>, vector<8x128xf32>
    %cst_100 = arith.constant 1.000000e+00 : f32
    %319 = vector.broadcast %cst_100 : f32 to vector<8x128xf32>
    %320 = arith.select %315, %319, %301 : vector<8x128xi1>, vector<8x128xf32>
    %cst_101 = arith.constant 0.000000e+00 : f32
    %321 = vector.broadcast %cst_101 : f32 to vector<8x128xf32>
    %322 = arith.select %315, %321, %303 : vector<8x128xi1>, vector<8x128xf32>
    %323 = arith.addf %159, %72 : vector<8x128xf32>
    %324 = arith.subf %323, %80 : vector<8x128xf32>
    %325 = arith.subf %324, %88 : vector<8x128xf32>
    %326 = arith.mulf %325, %325 : vector<8x128xf32>
    %327 = arith.addf %164, %96 : vector<8x128xf32>
    %328 = arith.subf %327, %104 : vector<8x128xf32>
    %329 = arith.subf %328, %112 : vector<8x128xf32>
    %330 = arith.mulf %329, %329 : vector<8x128xf32>
    %331 = arith.addf %326, %330 : vector<8x128xf32>
    %332 = arith.addf %169, %120 : vector<8x128xf32>
    %333 = arith.subf %332, %128 : vector<8x128xf32>
    %334 = arith.subf %333, %136 : vector<8x128xf32>
    %335 = arith.mulf %334, %334 : vector<8x128xf32>
    %336 = arith.addf %331, %335 : vector<8x128xf32>
    %337 = arith.cmpf olt, %336, %316 : vector<8x128xf32>
    %338 = arith.select %337, %336, %316 : vector<8x128xi1>, vector<8x128xf32>
    %cst_102 = arith.constant -1.000000e+00 : f32
    %339 = vector.broadcast %cst_102 : f32 to vector<8x128xf32>
    %340 = arith.select %337, %339, %318 : vector<8x128xi1>, vector<8x128xf32>
    %cst_103 = arith.constant 1.000000e+00 : f32
    %341 = vector.broadcast %cst_103 : f32 to vector<8x128xf32>
    %342 = arith.select %337, %341, %320 : vector<8x128xi1>, vector<8x128xf32>
    %cst_104 = arith.constant 1.000000e+00 : f32
    %343 = vector.broadcast %cst_104 : f32 to vector<8x128xf32>
    %344 = arith.select %337, %343, %322 : vector<8x128xi1>, vector<8x128xf32>
    %345 = arith.addf %159, %80 : vector<8x128xf32>
    %346 = arith.addf %345, %88 : vector<8x128xf32>
    %347 = arith.mulf %346, %346 : vector<8x128xf32>
    %348 = arith.addf %164, %104 : vector<8x128xf32>
    %349 = arith.addf %348, %112 : vector<8x128xf32>
    %350 = arith.mulf %349, %349 : vector<8x128xf32>
    %351 = arith.addf %347, %350 : vector<8x128xf32>
    %352 = arith.addf %169, %128 : vector<8x128xf32>
    %353 = arith.addf %352, %136 : vector<8x128xf32>
    %354 = arith.mulf %353, %353 : vector<8x128xf32>
    %355 = arith.addf %351, %354 : vector<8x128xf32>
    %356 = arith.cmpf olt, %355, %338 : vector<8x128xf32>
    %357 = arith.select %356, %355, %338 : vector<8x128xi1>, vector<8x128xf32>
    %cst_105 = arith.constant 0.000000e+00 : f32
    %358 = vector.broadcast %cst_105 : f32 to vector<8x128xf32>
    %359 = arith.select %356, %358, %340 : vector<8x128xi1>, vector<8x128xf32>
    %cst_106 = arith.constant -1.000000e+00 : f32
    %360 = vector.broadcast %cst_106 : f32 to vector<8x128xf32>
    %361 = arith.select %356, %360, %342 : vector<8x128xi1>, vector<8x128xf32>
    %cst_107 = arith.constant -1.000000e+00 : f32
    %362 = vector.broadcast %cst_107 : f32 to vector<8x128xf32>
    %363 = arith.select %356, %362, %344 : vector<8x128xi1>, vector<8x128xf32>
    %364 = arith.addf %159, %80 : vector<8x128xf32>
    %365 = arith.mulf %364, %364 : vector<8x128xf32>
    %366 = arith.addf %164, %104 : vector<8x128xf32>
    %367 = arith.mulf %366, %366 : vector<8x128xf32>
    %368 = arith.addf %365, %367 : vector<8x128xf32>
    %369 = arith.addf %169, %128 : vector<8x128xf32>
    %370 = arith.mulf %369, %369 : vector<8x128xf32>
    %371 = arith.addf %368, %370 : vector<8x128xf32>
    %372 = arith.cmpf olt, %371, %357 : vector<8x128xf32>
    %373 = arith.select %372, %371, %357 : vector<8x128xi1>, vector<8x128xf32>
    %cst_108 = arith.constant 0.000000e+00 : f32
    %374 = vector.broadcast %cst_108 : f32 to vector<8x128xf32>
    %375 = arith.select %372, %374, %359 : vector<8x128xi1>, vector<8x128xf32>
    %cst_109 = arith.constant -1.000000e+00 : f32
    %376 = vector.broadcast %cst_109 : f32 to vector<8x128xf32>
    %377 = arith.select %372, %376, %361 : vector<8x128xi1>, vector<8x128xf32>
    %cst_110 = arith.constant 0.000000e+00 : f32
    %378 = vector.broadcast %cst_110 : f32 to vector<8x128xf32>
    %379 = arith.select %372, %378, %363 : vector<8x128xi1>, vector<8x128xf32>
    %380 = arith.addf %159, %80 : vector<8x128xf32>
    %381 = arith.subf %380, %88 : vector<8x128xf32>
    %382 = arith.mulf %381, %381 : vector<8x128xf32>
    %383 = arith.addf %164, %104 : vector<8x128xf32>
    %384 = arith.subf %383, %112 : vector<8x128xf32>
    %385 = arith.mulf %384, %384 : vector<8x128xf32>
    %386 = arith.addf %382, %385 : vector<8x128xf32>
    %387 = arith.addf %169, %128 : vector<8x128xf32>
    %388 = arith.subf %387, %136 : vector<8x128xf32>
    %389 = arith.mulf %388, %388 : vector<8x128xf32>
    %390 = arith.addf %386, %389 : vector<8x128xf32>
    %391 = arith.cmpf olt, %390, %373 : vector<8x128xf32>
    %392 = arith.select %391, %390, %373 : vector<8x128xi1>, vector<8x128xf32>
    %cst_111 = arith.constant 0.000000e+00 : f32
    %393 = vector.broadcast %cst_111 : f32 to vector<8x128xf32>
    %394 = arith.select %391, %393, %375 : vector<8x128xi1>, vector<8x128xf32>
    %cst_112 = arith.constant -1.000000e+00 : f32
    %395 = vector.broadcast %cst_112 : f32 to vector<8x128xf32>
    %396 = arith.select %391, %395, %377 : vector<8x128xi1>, vector<8x128xf32>
    %cst_113 = arith.constant 1.000000e+00 : f32
    %397 = vector.broadcast %cst_113 : f32 to vector<8x128xf32>
    %398 = arith.select %391, %397, %379 : vector<8x128xi1>, vector<8x128xf32>
    %399 = arith.addf %159, %88 : vector<8x128xf32>
    %400 = arith.mulf %399, %399 : vector<8x128xf32>
    %401 = arith.addf %164, %112 : vector<8x128xf32>
    %402 = arith.mulf %401, %401 : vector<8x128xf32>
    %403 = arith.addf %400, %402 : vector<8x128xf32>
    %404 = arith.addf %169, %136 : vector<8x128xf32>
    %405 = arith.mulf %404, %404 : vector<8x128xf32>
    %406 = arith.addf %403, %405 : vector<8x128xf32>
    %407 = arith.cmpf olt, %406, %392 : vector<8x128xf32>
    %408 = arith.select %407, %406, %392 : vector<8x128xi1>, vector<8x128xf32>
    %cst_114 = arith.constant 0.000000e+00 : f32
    %409 = vector.broadcast %cst_114 : f32 to vector<8x128xf32>
    %410 = arith.select %407, %409, %394 : vector<8x128xi1>, vector<8x128xf32>
    %cst_115 = arith.constant 0.000000e+00 : f32
    %411 = vector.broadcast %cst_115 : f32 to vector<8x128xf32>
    %412 = arith.select %407, %411, %396 : vector<8x128xi1>, vector<8x128xf32>
    %cst_116 = arith.constant -1.000000e+00 : f32
    %413 = vector.broadcast %cst_116 : f32 to vector<8x128xf32>
    %414 = arith.select %407, %413, %398 : vector<8x128xi1>, vector<8x128xf32>
    %415 = arith.mulf %159, %159 : vector<8x128xf32>
    %416 = arith.mulf %164, %164 : vector<8x128xf32>
    %417 = arith.addf %415, %416 : vector<8x128xf32>
    %418 = arith.mulf %169, %169 : vector<8x128xf32>
    %419 = arith.addf %417, %418 : vector<8x128xf32>
    %420 = arith.cmpf olt, %419, %408 : vector<8x128xf32>
    %421 = arith.select %420, %419, %408 : vector<8x128xi1>, vector<8x128xf32>
    %cst_117 = arith.constant 0.000000e+00 : f32
    %422 = vector.broadcast %cst_117 : f32 to vector<8x128xf32>
    %423 = arith.select %420, %422, %410 : vector<8x128xi1>, vector<8x128xf32>
    %cst_118 = arith.constant 0.000000e+00 : f32
    %424 = vector.broadcast %cst_118 : f32 to vector<8x128xf32>
    %425 = arith.select %420, %424, %412 : vector<8x128xi1>, vector<8x128xf32>
    %cst_119 = arith.constant 0.000000e+00 : f32
    %426 = vector.broadcast %cst_119 : f32 to vector<8x128xf32>
    %427 = arith.select %420, %426, %414 : vector<8x128xi1>, vector<8x128xf32>
    %428 = arith.subf %159, %88 : vector<8x128xf32>
    %429 = arith.mulf %428, %428 : vector<8x128xf32>
    %430 = arith.subf %164, %112 : vector<8x128xf32>
    %431 = arith.mulf %430, %430 : vector<8x128xf32>
    %432 = arith.addf %429, %431 : vector<8x128xf32>
    %433 = arith.subf %169, %136 : vector<8x128xf32>
    %434 = arith.mulf %433, %433 : vector<8x128xf32>
    %435 = arith.addf %432, %434 : vector<8x128xf32>
    %436 = arith.cmpf olt, %435, %421 : vector<8x128xf32>
    %437 = arith.select %436, %435, %421 : vector<8x128xi1>, vector<8x128xf32>
    %cst_120 = arith.constant 0.000000e+00 : f32
    %438 = vector.broadcast %cst_120 : f32 to vector<8x128xf32>
    %439 = arith.select %436, %438, %423 : vector<8x128xi1>, vector<8x128xf32>
    %cst_121 = arith.constant 0.000000e+00 : f32
    %440 = vector.broadcast %cst_121 : f32 to vector<8x128xf32>
    %441 = arith.select %436, %440, %425 : vector<8x128xi1>, vector<8x128xf32>
    %cst_122 = arith.constant 1.000000e+00 : f32
    %442 = vector.broadcast %cst_122 : f32 to vector<8x128xf32>
    %443 = arith.select %436, %442, %427 : vector<8x128xi1>, vector<8x128xf32>
    %444 = arith.subf %159, %80 : vector<8x128xf32>
    %445 = arith.addf %444, %88 : vector<8x128xf32>
    %446 = arith.mulf %445, %445 : vector<8x128xf32>
    %447 = arith.subf %164, %104 : vector<8x128xf32>
    %448 = arith.addf %447, %112 : vector<8x128xf32>
    %449 = arith.mulf %448, %448 : vector<8x128xf32>
    %450 = arith.addf %446, %449 : vector<8x128xf32>
    %451 = arith.subf %169, %128 : vector<8x128xf32>
    %452 = arith.addf %451, %136 : vector<8x128xf32>
    %453 = arith.mulf %452, %452 : vector<8x128xf32>
    %454 = arith.addf %450, %453 : vector<8x128xf32>
    %455 = arith.cmpf olt, %454, %437 : vector<8x128xf32>
    %456 = arith.select %455, %454, %437 : vector<8x128xi1>, vector<8x128xf32>
    %cst_123 = arith.constant 0.000000e+00 : f32
    %457 = vector.broadcast %cst_123 : f32 to vector<8x128xf32>
    %458 = arith.select %455, %457, %439 : vector<8x128xi1>, vector<8x128xf32>
    %cst_124 = arith.constant 1.000000e+00 : f32
    %459 = vector.broadcast %cst_124 : f32 to vector<8x128xf32>
    %460 = arith.select %455, %459, %441 : vector<8x128xi1>, vector<8x128xf32>
    %cst_125 = arith.constant -1.000000e+00 : f32
    %461 = vector.broadcast %cst_125 : f32 to vector<8x128xf32>
    %462 = arith.select %455, %461, %443 : vector<8x128xi1>, vector<8x128xf32>
    %463 = arith.subf %159, %80 : vector<8x128xf32>
    %464 = arith.mulf %463, %463 : vector<8x128xf32>
    %465 = arith.subf %164, %104 : vector<8x128xf32>
    %466 = arith.mulf %465, %465 : vector<8x128xf32>
    %467 = arith.addf %464, %466 : vector<8x128xf32>
    %468 = arith.subf %169, %128 : vector<8x128xf32>
    %469 = arith.mulf %468, %468 : vector<8x128xf32>
    %470 = arith.addf %467, %469 : vector<8x128xf32>
    %471 = arith.cmpf olt, %470, %456 : vector<8x128xf32>
    %472 = arith.select %471, %470, %456 : vector<8x128xi1>, vector<8x128xf32>
    %cst_126 = arith.constant 0.000000e+00 : f32
    %473 = vector.broadcast %cst_126 : f32 to vector<8x128xf32>
    %474 = arith.select %471, %473, %458 : vector<8x128xi1>, vector<8x128xf32>
    %cst_127 = arith.constant 1.000000e+00 : f32
    %475 = vector.broadcast %cst_127 : f32 to vector<8x128xf32>
    %476 = arith.select %471, %475, %460 : vector<8x128xi1>, vector<8x128xf32>
    %cst_128 = arith.constant 0.000000e+00 : f32
    %477 = vector.broadcast %cst_128 : f32 to vector<8x128xf32>
    %478 = arith.select %471, %477, %462 : vector<8x128xi1>, vector<8x128xf32>
    %479 = arith.subf %159, %80 : vector<8x128xf32>
    %480 = arith.subf %479, %88 : vector<8x128xf32>
    %481 = arith.mulf %480, %480 : vector<8x128xf32>
    %482 = arith.subf %164, %104 : vector<8x128xf32>
    %483 = arith.subf %482, %112 : vector<8x128xf32>
    %484 = arith.mulf %483, %483 : vector<8x128xf32>
    %485 = arith.addf %481, %484 : vector<8x128xf32>
    %486 = arith.subf %169, %128 : vector<8x128xf32>
    %487 = arith.subf %486, %136 : vector<8x128xf32>
    %488 = arith.mulf %487, %487 : vector<8x128xf32>
    %489 = arith.addf %485, %488 : vector<8x128xf32>
    %490 = arith.cmpf olt, %489, %472 : vector<8x128xf32>
    %491 = arith.select %490, %489, %472 : vector<8x128xi1>, vector<8x128xf32>
    %cst_129 = arith.constant 0.000000e+00 : f32
    %492 = vector.broadcast %cst_129 : f32 to vector<8x128xf32>
    %493 = arith.select %490, %492, %474 : vector<8x128xi1>, vector<8x128xf32>
    %cst_130 = arith.constant 1.000000e+00 : f32
    %494 = vector.broadcast %cst_130 : f32 to vector<8x128xf32>
    %495 = arith.select %490, %494, %476 : vector<8x128xi1>, vector<8x128xf32>
    %cst_131 = arith.constant 1.000000e+00 : f32
    %496 = vector.broadcast %cst_131 : f32 to vector<8x128xf32>
    %497 = arith.select %490, %496, %478 : vector<8x128xi1>, vector<8x128xf32>
    %498 = arith.subf %159, %72 : vector<8x128xf32>
    %499 = arith.addf %498, %80 : vector<8x128xf32>
    %500 = arith.addf %499, %88 : vector<8x128xf32>
    %501 = arith.mulf %500, %500 : vector<8x128xf32>
    %502 = arith.subf %164, %96 : vector<8x128xf32>
    %503 = arith.addf %502, %104 : vector<8x128xf32>
    %504 = arith.addf %503, %112 : vector<8x128xf32>
    %505 = arith.mulf %504, %504 : vector<8x128xf32>
    %506 = arith.addf %501, %505 : vector<8x128xf32>
    %507 = arith.subf %169, %120 : vector<8x128xf32>
    %508 = arith.addf %507, %128 : vector<8x128xf32>
    %509 = arith.addf %508, %136 : vector<8x128xf32>
    %510 = arith.mulf %509, %509 : vector<8x128xf32>
    %511 = arith.addf %506, %510 : vector<8x128xf32>
    %512 = arith.cmpf olt, %511, %491 : vector<8x128xf32>
    %513 = arith.select %512, %511, %491 : vector<8x128xi1>, vector<8x128xf32>
    %cst_132 = arith.constant 1.000000e+00 : f32
    %514 = vector.broadcast %cst_132 : f32 to vector<8x128xf32>
    %515 = arith.select %512, %514, %493 : vector<8x128xi1>, vector<8x128xf32>
    %cst_133 = arith.constant -1.000000e+00 : f32
    %516 = vector.broadcast %cst_133 : f32 to vector<8x128xf32>
    %517 = arith.select %512, %516, %495 : vector<8x128xi1>, vector<8x128xf32>
    %cst_134 = arith.constant -1.000000e+00 : f32
    %518 = vector.broadcast %cst_134 : f32 to vector<8x128xf32>
    %519 = arith.select %512, %518, %497 : vector<8x128xi1>, vector<8x128xf32>
    %520 = arith.subf %159, %72 : vector<8x128xf32>
    %521 = arith.addf %520, %80 : vector<8x128xf32>
    %522 = arith.mulf %521, %521 : vector<8x128xf32>
    %523 = arith.subf %164, %96 : vector<8x128xf32>
    %524 = arith.addf %523, %104 : vector<8x128xf32>
    %525 = arith.mulf %524, %524 : vector<8x128xf32>
    %526 = arith.addf %522, %525 : vector<8x128xf32>
    %527 = arith.subf %169, %120 : vector<8x128xf32>
    %528 = arith.addf %527, %128 : vector<8x128xf32>
    %529 = arith.mulf %528, %528 : vector<8x128xf32>
    %530 = arith.addf %526, %529 : vector<8x128xf32>
    %531 = arith.cmpf olt, %530, %513 : vector<8x128xf32>
    %532 = arith.select %531, %530, %513 : vector<8x128xi1>, vector<8x128xf32>
    %cst_135 = arith.constant 1.000000e+00 : f32
    %533 = vector.broadcast %cst_135 : f32 to vector<8x128xf32>
    %534 = arith.select %531, %533, %515 : vector<8x128xi1>, vector<8x128xf32>
    %cst_136 = arith.constant -1.000000e+00 : f32
    %535 = vector.broadcast %cst_136 : f32 to vector<8x128xf32>
    %536 = arith.select %531, %535, %517 : vector<8x128xi1>, vector<8x128xf32>
    %cst_137 = arith.constant 0.000000e+00 : f32
    %537 = vector.broadcast %cst_137 : f32 to vector<8x128xf32>
    %538 = arith.select %531, %537, %519 : vector<8x128xi1>, vector<8x128xf32>
    %539 = arith.subf %159, %72 : vector<8x128xf32>
    %540 = arith.addf %539, %80 : vector<8x128xf32>
    %541 = arith.subf %540, %88 : vector<8x128xf32>
    %542 = arith.mulf %541, %541 : vector<8x128xf32>
    %543 = arith.subf %164, %96 : vector<8x128xf32>
    %544 = arith.addf %543, %104 : vector<8x128xf32>
    %545 = arith.subf %544, %112 : vector<8x128xf32>
    %546 = arith.mulf %545, %545 : vector<8x128xf32>
    %547 = arith.addf %542, %546 : vector<8x128xf32>
    %548 = arith.subf %169, %120 : vector<8x128xf32>
    %549 = arith.addf %548, %128 : vector<8x128xf32>
    %550 = arith.subf %549, %136 : vector<8x128xf32>
    %551 = arith.mulf %550, %550 : vector<8x128xf32>
    %552 = arith.addf %547, %551 : vector<8x128xf32>
    %553 = arith.cmpf olt, %552, %532 : vector<8x128xf32>
    %554 = arith.select %553, %552, %532 : vector<8x128xi1>, vector<8x128xf32>
    %cst_138 = arith.constant 1.000000e+00 : f32
    %555 = vector.broadcast %cst_138 : f32 to vector<8x128xf32>
    %556 = arith.select %553, %555, %534 : vector<8x128xi1>, vector<8x128xf32>
    %cst_139 = arith.constant -1.000000e+00 : f32
    %557 = vector.broadcast %cst_139 : f32 to vector<8x128xf32>
    %558 = arith.select %553, %557, %536 : vector<8x128xi1>, vector<8x128xf32>
    %cst_140 = arith.constant 1.000000e+00 : f32
    %559 = vector.broadcast %cst_140 : f32 to vector<8x128xf32>
    %560 = arith.select %553, %559, %538 : vector<8x128xi1>, vector<8x128xf32>
    %561 = arith.subf %159, %72 : vector<8x128xf32>
    %562 = arith.addf %561, %88 : vector<8x128xf32>
    %563 = arith.mulf %562, %562 : vector<8x128xf32>
    %564 = arith.subf %164, %96 : vector<8x128xf32>
    %565 = arith.addf %564, %112 : vector<8x128xf32>
    %566 = arith.mulf %565, %565 : vector<8x128xf32>
    %567 = arith.addf %563, %566 : vector<8x128xf32>
    %568 = arith.subf %169, %120 : vector<8x128xf32>
    %569 = arith.addf %568, %136 : vector<8x128xf32>
    %570 = arith.mulf %569, %569 : vector<8x128xf32>
    %571 = arith.addf %567, %570 : vector<8x128xf32>
    %572 = arith.cmpf olt, %571, %554 : vector<8x128xf32>
    %573 = arith.select %572, %571, %554 : vector<8x128xi1>, vector<8x128xf32>
    %cst_141 = arith.constant 1.000000e+00 : f32
    %574 = vector.broadcast %cst_141 : f32 to vector<8x128xf32>
    %575 = arith.select %572, %574, %556 : vector<8x128xi1>, vector<8x128xf32>
    %cst_142 = arith.constant 0.000000e+00 : f32
    %576 = vector.broadcast %cst_142 : f32 to vector<8x128xf32>
    %577 = arith.select %572, %576, %558 : vector<8x128xi1>, vector<8x128xf32>
    %cst_143 = arith.constant -1.000000e+00 : f32
    %578 = vector.broadcast %cst_143 : f32 to vector<8x128xf32>
    %579 = arith.select %572, %578, %560 : vector<8x128xi1>, vector<8x128xf32>
    %580 = arith.subf %159, %72 : vector<8x128xf32>
    %581 = arith.mulf %580, %580 : vector<8x128xf32>
    %582 = arith.subf %164, %96 : vector<8x128xf32>
    %583 = arith.mulf %582, %582 : vector<8x128xf32>
    %584 = arith.addf %581, %583 : vector<8x128xf32>
    %585 = arith.subf %169, %120 : vector<8x128xf32>
    %586 = arith.mulf %585, %585 : vector<8x128xf32>
    %587 = arith.addf %584, %586 : vector<8x128xf32>
    %588 = arith.cmpf olt, %587, %573 : vector<8x128xf32>
    %589 = arith.select %588, %587, %573 : vector<8x128xi1>, vector<8x128xf32>
    %cst_144 = arith.constant 1.000000e+00 : f32
    %590 = vector.broadcast %cst_144 : f32 to vector<8x128xf32>
    %591 = arith.select %588, %590, %575 : vector<8x128xi1>, vector<8x128xf32>
    %cst_145 = arith.constant 0.000000e+00 : f32
    %592 = vector.broadcast %cst_145 : f32 to vector<8x128xf32>
    %593 = arith.select %588, %592, %577 : vector<8x128xi1>, vector<8x128xf32>
    %cst_146 = arith.constant 0.000000e+00 : f32
    %594 = vector.broadcast %cst_146 : f32 to vector<8x128xf32>
    %595 = arith.select %588, %594, %579 : vector<8x128xi1>, vector<8x128xf32>
    %596 = arith.subf %159, %72 : vector<8x128xf32>
    %597 = arith.subf %596, %88 : vector<8x128xf32>
    %598 = arith.mulf %597, %597 : vector<8x128xf32>
    %599 = arith.subf %164, %96 : vector<8x128xf32>
    %600 = arith.subf %599, %112 : vector<8x128xf32>
    %601 = arith.mulf %600, %600 : vector<8x128xf32>
    %602 = arith.addf %598, %601 : vector<8x128xf32>
    %603 = arith.subf %169, %120 : vector<8x128xf32>
    %604 = arith.subf %603, %136 : vector<8x128xf32>
    %605 = arith.mulf %604, %604 : vector<8x128xf32>
    %606 = arith.addf %602, %605 : vector<8x128xf32>
    %607 = arith.cmpf olt, %606, %589 : vector<8x128xf32>
    %608 = arith.select %607, %606, %589 : vector<8x128xi1>, vector<8x128xf32>
    %cst_147 = arith.constant 1.000000e+00 : f32
    %609 = vector.broadcast %cst_147 : f32 to vector<8x128xf32>
    %610 = arith.select %607, %609, %591 : vector<8x128xi1>, vector<8x128xf32>
    %cst_148 = arith.constant 0.000000e+00 : f32
    %611 = vector.broadcast %cst_148 : f32 to vector<8x128xf32>
    %612 = arith.select %607, %611, %593 : vector<8x128xi1>, vector<8x128xf32>
    %cst_149 = arith.constant 1.000000e+00 : f32
    %613 = vector.broadcast %cst_149 : f32 to vector<8x128xf32>
    %614 = arith.select %607, %613, %595 : vector<8x128xi1>, vector<8x128xf32>
    %615 = arith.subf %159, %72 : vector<8x128xf32>
    %616 = arith.subf %615, %80 : vector<8x128xf32>
    %617 = arith.addf %616, %88 : vector<8x128xf32>
    %618 = arith.mulf %617, %617 : vector<8x128xf32>
    %619 = arith.subf %164, %96 : vector<8x128xf32>
    %620 = arith.subf %619, %104 : vector<8x128xf32>
    %621 = arith.addf %620, %112 : vector<8x128xf32>
    %622 = arith.mulf %621, %621 : vector<8x128xf32>
    %623 = arith.addf %618, %622 : vector<8x128xf32>
    %624 = arith.subf %169, %120 : vector<8x128xf32>
    %625 = arith.subf %624, %128 : vector<8x128xf32>
    %626 = arith.addf %625, %136 : vector<8x128xf32>
    %627 = arith.mulf %626, %626 : vector<8x128xf32>
    %628 = arith.addf %623, %627 : vector<8x128xf32>
    %629 = arith.cmpf olt, %628, %608 : vector<8x128xf32>
    %630 = arith.select %629, %628, %608 : vector<8x128xi1>, vector<8x128xf32>
    %cst_150 = arith.constant 1.000000e+00 : f32
    %631 = vector.broadcast %cst_150 : f32 to vector<8x128xf32>
    %632 = arith.select %629, %631, %610 : vector<8x128xi1>, vector<8x128xf32>
    %cst_151 = arith.constant 1.000000e+00 : f32
    %633 = vector.broadcast %cst_151 : f32 to vector<8x128xf32>
    %634 = arith.select %629, %633, %612 : vector<8x128xi1>, vector<8x128xf32>
    %cst_152 = arith.constant -1.000000e+00 : f32
    %635 = vector.broadcast %cst_152 : f32 to vector<8x128xf32>
    %636 = arith.select %629, %635, %614 : vector<8x128xi1>, vector<8x128xf32>
    %637 = arith.subf %159, %72 : vector<8x128xf32>
    %638 = arith.subf %637, %80 : vector<8x128xf32>
    %639 = arith.mulf %638, %638 : vector<8x128xf32>
    %640 = arith.subf %164, %96 : vector<8x128xf32>
    %641 = arith.subf %640, %104 : vector<8x128xf32>
    %642 = arith.mulf %641, %641 : vector<8x128xf32>
    %643 = arith.addf %639, %642 : vector<8x128xf32>
    %644 = arith.subf %169, %120 : vector<8x128xf32>
    %645 = arith.subf %644, %128 : vector<8x128xf32>
    %646 = arith.mulf %645, %645 : vector<8x128xf32>
    %647 = arith.addf %643, %646 : vector<8x128xf32>
    %648 = arith.cmpf olt, %647, %630 : vector<8x128xf32>
    %649 = arith.select %648, %647, %630 : vector<8x128xi1>, vector<8x128xf32>
    %cst_153 = arith.constant 1.000000e+00 : f32
    %650 = vector.broadcast %cst_153 : f32 to vector<8x128xf32>
    %651 = arith.select %648, %650, %632 : vector<8x128xi1>, vector<8x128xf32>
    %cst_154 = arith.constant 1.000000e+00 : f32
    %652 = vector.broadcast %cst_154 : f32 to vector<8x128xf32>
    %653 = arith.select %648, %652, %634 : vector<8x128xi1>, vector<8x128xf32>
    %cst_155 = arith.constant 0.000000e+00 : f32
    %654 = vector.broadcast %cst_155 : f32 to vector<8x128xf32>
    %655 = arith.select %648, %654, %636 : vector<8x128xi1>, vector<8x128xf32>
    %656 = arith.subf %159, %72 : vector<8x128xf32>
    %657 = arith.subf %656, %80 : vector<8x128xf32>
    %658 = arith.subf %657, %88 : vector<8x128xf32>
    %659 = arith.mulf %658, %658 : vector<8x128xf32>
    %660 = arith.subf %164, %96 : vector<8x128xf32>
    %661 = arith.subf %660, %104 : vector<8x128xf32>
    %662 = arith.subf %661, %112 : vector<8x128xf32>
    %663 = arith.mulf %662, %662 : vector<8x128xf32>
    %664 = arith.addf %659, %663 : vector<8x128xf32>
    %665 = arith.subf %169, %120 : vector<8x128xf32>
    %666 = arith.subf %665, %128 : vector<8x128xf32>
    %667 = arith.subf %666, %136 : vector<8x128xf32>
    %668 = arith.mulf %667, %667 : vector<8x128xf32>
    %669 = arith.addf %664, %668 : vector<8x128xf32>
    %670 = arith.cmpf olt, %669, %649 : vector<8x128xf32>
    %cst_156 = arith.constant 1.000000e+00 : f32
    %671 = vector.broadcast %cst_156 : f32 to vector<8x128xf32>
    %672 = arith.select %670, %671, %651 : vector<8x128xi1>, vector<8x128xf32>
    %cst_157 = arith.constant 1.000000e+00 : f32
    %673 = vector.broadcast %cst_157 : f32 to vector<8x128xf32>
    %674 = arith.select %670, %673, %653 : vector<8x128xi1>, vector<8x128xf32>
    %cst_158 = arith.constant 1.000000e+00 : f32
    %675 = vector.broadcast %cst_158 : f32 to vector<8x128xf32>
    %676 = arith.select %670, %675, %655 : vector<8x128xi1>, vector<8x128xf32>
    %677 = arith.subf %152, %672 : vector<8x128xf32>
    %678 = arith.subf %153, %674 : vector<8x128xf32>
    %679 = arith.subf %154, %676 : vector<8x128xf32>
    %680 = math.absf %677 : vector<8x128xf32>
    %681 = math.absf %678 : vector<8x128xf32>
    %682 = math.absf %679 : vector<8x128xf32>
    %683 = arith.addf %680, %681 : vector<8x128xf32>
    %684 = arith.addf %683, %682 : vector<8x128xf32>
    %685 = arith.mulf %684, %64 : vector<8x128xf32>
    %686 = arith.addf %30, %685 : vector<8x128xf32>
    %c0_159 = arith.constant 0 : index
    %c0_160 = arith.constant 0 : index
    %687 = vector.load %arg4[%c0_159, %c0_160] : memref<8x128xf32, #tpu.memory_space<vmem>>, vector<8x128xf32>
    %688 = arith.addf %687, %686 : vector<8x128xf32>
    %c0_161 = arith.constant 0 : index
    %c0_162 = arith.constant 0 : index
    %689 = vector.load %arg4[%c0_161, %c0_162] : memref<8x128xf32, #tpu.memory_space<vmem>>, vector<8x128xf32>
    tpu.vector_store %arg4[%c0_161, %c0_162], %688 {strides = array<i32>} : memref<8x128xf32, #tpu.memory_space<vmem>>, vector<8x128xf32>,
    return
  }
  func.func @transform_0(%arg0: i32, %arg1: i32) -> (i32, i32) {
    %c0_i32 = arith.constant 0 : i32
    %c0_i32_0 = arith.constant 0 : i32
    %c0_i32_1 = arith.constant 0 : i32
    return %c0_i32, %c0_i32_0 : i32, i32
  }
  func.func @transform_1(%arg0: i32, %arg1: i32) -> (i32, i32, i32) {
    %c1_i32 = arith.constant 1 : i32
    %0 = arith.muli %arg0, %c1_i32 : i32
    %1 = arith.addi %0, %arg1 : i32
    %c0_i32 = arith.constant 0 : i32
    %c0_i32_0 = arith.constant 0 : i32
    %c0_i32_1 = arith.constant 0 : i32
    return %c0_i32, %c0_i32_0, %1 : i32, i32, i32
  }
  func.func @transform_2(%arg0: i32, %arg1: i32) -> (i32, i32) {
    %c0_i32 = arith.constant 0 : i32
    %c0_i32_0 = arith.constant 0 : i32
    return %c0_i32, %arg0 : i32, i32
  }
}

</mosaic_0001>

<llo_original>
// kernel: tpu_custom_call.1
$region0: #{tpu_custom_call.1}
  #allocation0 [shape = 'u32[]', space=smem, size = 0x4, offset = 0x4, fixed_abs, tag = 'smem constant byte address 0x4 - core index']
  #allocation1 [shape = 'u32[72,128]{1,0:T(1,128)}', space=vmem, size = 0x9000, scoped, tag = 'internal scratch']
  %s0 = inlined_call_operand.hbm [shape: f32[3,9], index: 0, kind: input, shape index: {}]
  %s1 = inlined_call_operand.hbm [shape: f32[10,8,256], index: 1, kind: input, shape index: {}]
  %s2 = inlined_call_operand.hbm [shape: f32[8,256], index: 2, kind: output, shape index: {}]
  %s3 = sld [smem:[#allocation0]]
  $region53: #{tpu_custom_call.1} parent=0
    _
  %s5 = ssub.s32 1, %s3
  %s6 = scalar_select 0, %s5, %s3
  $region1: #{tpu_custom_call.1} parent=0
    #allocation2 [shape = 'u8[2048]{0}', space=smem, size = 0x800, scoped, tag = 'input window, operand 0, single buffered']
    #allocation3 [shape = 's32[2]{0}', space=sflag, size = 0x8, scoped, tag = 'scoped memory for tpu_custom_call.1']
    #allocation4 [shape = 's32[2]{0}', space=sflag, size = 0x8, scoped, tag = 'scoped memory for tpu_custom_call.1']
    #allocation5 [shape = 's32[2]{0}', space=sflag, size = 0x8, scoped, tag = 'scoped memory for tpu_custom_call.1']
    #allocation6 [shape = 'u8[81920]{0}', space=vmem, size = 0x14000, scoped, tag = 'input window, operand 1']
    #allocation7 [shape = 'u8[8192]{0}', space=vmem, size = 0x2000, scoped, tag = 'output window, operand 0']
    %7 = vsyncpa [#allocation5], 0
    %8 = vsyncpa [#allocation3], 0
    %s9 = scalar_lea.sflag [#allocation3], 1
    %10 = vsyncpa %s9, 0
    %11 = vsyncpa [#allocation4], 0
    %s12 = scalar_lea.sflag [#allocation4], 1
    %13 = vsyncpa %s12, 0
    loop: start=0, step=1, limit=4
    $region2: #{tpu_custom_call.1} parent=1 // loop_pre_header
      _
    $region3: #{tpu_custom_call.1} parent=1 // loop_header
      %s15 = sphi 0, %s19
      %p16 = scmp.ge.s32.totalorder %s15, 4
      %s22 = sphi 0, %s34
      %s23 = sphi 0, %s30
      %s24 = sphi 0, %s22
      %s25 = sphi 0, %s23
      %s26 = sphi 0, %s24
      %s27 = sphi 0, %s25
      %s35 = sphi 0, %s35
      %s37 = sphi 0, %s35
      %s38 = sphi 0, %s37
      %s52 = sphi 0, %s38
      %s60 = sphi 0, %s62
      %s63 = sphi 0, %s60
      %s64 = sphi 0, %s63
      %s80 = sphi 0, %s64
      %s86 = sphi 0, %s88
      %s89 = sphi 0, %s86
      %s90 = sphi 0, %s89
      %s106 = sphi 0, %s90
    $region4: #{tpu_custom_call.1} parent=1 // loop_header_branch
      %18 = sbr.rel (%p16) target = $region8
    $region5: #{tpu_custom_call.1} parent=1 // loop_body
      %s20 = ssub.s32 %s15, 1
      %s21 = ssub.s32 %s15, 2
      %s28 = sadd.s32 1, %s23
      %p29 = scmp.ge.s32.totalorder %s28, 1
      %s30 = scalar_select %p29, 0, %s28
      %s31 = sadd.s32 1, %s22
      %s32 = scalar_select %p29, %s31, %s22
      %p33 = scmp.ge.s32.totalorder %s32, 2
      %s34 = scalar_select %p33, 0, %s32
      %s36 = sadd.s32 %s35, 1
      %p39 = scmp.eq.s32.totalorder %s15, 1
      %p40 = scmp.ne.s32.totalorder %s35, %s37
      %p41 = scmp.eq.s32.totalorder %s15, 0
      %p42 = por %p40, %p41
      %p43 = scmp.ne.s32.totalorder %s35, %s37
      %p44 = scmp.eq.s32.totalorder %s20, 1
      %p45 = por %p43, %p44
      %p46 = scmp.ne.s32.totalorder %s37, %s38
      %p47 = scmp.eq.s32.totalorder %s20, 0
      %p48 = por %p46, %p47
      %p49 = scmp.ne.s32.totalorder %s37, %s38
      %p50 = scmp.eq.s32.totalorder %s21, 1
      %p51 = por %p49, %p50
      %p53 = scmp.ne.s32.totalorder %s38, %s52
      %p54 = scmp.eq.s32.totalorder %s21, 0
      %p55 = por %p53, %p54
      %s56 = sadd.s32 %s22, %s23
      %s57 = sadd.s32 %s34, %s30
      %s58 = ssub.s32 %s56, %s57
      %p59 = scmp.eq.s32.totalorder %s58, 0
      %s61 = sadd.s32 %s60, 1
      %s62 = scalar_select %p59, %s60, %s61
      %p65 = pneg %p59
      %p66 = scmp.eq.s32.totalorder %s15, 1
      %p67 = por %p65, %p66
      %p68 = scmp.ne.s32.totalorder %s60, %s63
      %p69 = scmp.eq.s32.totalorder %s15, 0
      %p70 = por %p68, %p69
      %p71 = scmp.ne.s32.totalorder %s60, %s63
      %p72 = scmp.eq.s32.totalorder %s20, 1
      %p73 = por %p71, %p72
      %p74 = scmp.ne.s32.totalorder %s63, %s64
      %p75 = scmp.eq.s32.totalorder %s20, 0
      %p76 = por %p74, %p75
      %p77 = scmp.ne.s32.totalorder %s63, %s64
      %p78 = scmp.eq.s32.totalorder %s21, 1
      %p79 = por %p77, %p78
      %p81 = scmp.ne.s32.totalorder %s64, %s80
      %p82 = scmp.eq.s32.totalorder %s21, 0
      %p83 = por %p81, %p82
      %s84 = ssub.s32 %s22, %s34
      %p85 = scmp.eq.s32.totalorder %s84, 0
      %s87 = sadd.s32 %s86, 1
      %s88 = scalar_select %p85, %s86, %s87
      %p91 = pneg %p85
      %p92 = scmp.eq.s32.totalorder %s15, 1
      %p93 = por %p91, %p92
      %p94 = scmp.ne.s32.totalorder %s86, %s89
      %p95 = scmp.eq.s32.totalorder %s15, 0
      %p96 = por %p94, %p95
      %p97 = scmp.ne.s32.totalorder %s86, %s89
      %p98 = scmp.eq.s32.totalorder %s20, 1
      %p99 = por %p97, %p98
      %p100 = scmp.ne.s32.totalorder %s89, %s90
      %p101 = scmp.eq.s32.totalorder %s20, 0
      %p102 = por %p100, %p101
      %p103 = scmp.ne.s32.totalorder %s89, %s90
      %p104 = scmp.eq.s32.totalorder %s21, 1
      %p105 = por %p103, %p104
      %p107 = scmp.ne.s32.totalorder %s90, %s106
      %p108 = scmp.eq.s32.totalorder %s21, 0
      %p109 = por %p107, %p108
      %p110 = scmp.le.s32.totalorder 1, %s15
      %p111 = scmp.lt.s32.totalorder %s15, 3
      %p112 = pnand %p110, %p111
      %p113 = pneg %p112
      // Predicated region
      $region9: #{tpu_custom_call.1} parent=5 // pred_check
        _
      $region10: #{tpu_custom_call.1} parent=5 // pred_check_branch
        %115 = sbr.rel (%p112) target = $region12
      $region11: #{tpu_custom_call.1} parent=5 // pred_region
        %s116 = ssub.s32 %s15, 1
        // Predicated region
        $region13: #{tpu_custom_call.1} parent=11 // pred_check
          %p117 = pneg %p48
        $region14: #{tpu_custom_call.1} parent=11 // pred_check_branch
          %119 = sbr.rel (%p117) target = $region16
        $region15: #{tpu_custom_call.1} parent=11 // pred_region
          %121 = vsyncadd [#allocation5], 0
          %s123 = sshll.u32 %s0, 4
          %s124 = int_to_ptr.hbm [resolvable:$true] %s123
          %126 = dma.hbm_to_smem %s124, 64, [#allocation2], [#allocation5]
        $region16: #{tpu_custom_call.1} parent=11 // pred_fallthru
          _
      $region12: #{tpu_custom_call.1} parent=5 // pred_fallthru
        _
      %p127 = scmp.lt.s32.totalorder %s15, 2
      // Predicated region
      $region17: #{tpu_custom_call.1} parent=5 // pred_check
        %p128 = pneg %p127
      $region18: #{tpu_custom_call.1} parent=5 // pred_check_branch
        %130 = sbr.rel (%p128) target = $region20
      $region19: #{tpu_custom_call.1} parent=5 // pred_region
        // Predicated region
        $region21: #{tpu_custom_call.1} parent=19 // pred_check
          %p131 = pneg %p70
        $region22: #{tpu_custom_call.1} parent=19 // pred_check_branch
          %133 = sbr.rel (%p131) target = $region24
        $region23: #{tpu_custom_call.1} parent=19 // pred_region
          %s134 = sand.u32 %s60, 1
          %s135 = scalar_lea.sflag [#allocation3], %s134
          %s136 = sand.u32 %s60, 1
          %s137 = smul.addr %s136, 80
          %s138 = scalar_lea.vmem [#allocation6], %s137
          %s139 = sadd.s32 %s22, %s23
          %141 = vsyncadd %s135, 0
          %s142 = smul.addr %s139, 8
          %s143 = scalar_lea.hbm %s1, %s142
          %s144 = sshll.u32 %s143, 4
          %s145 = int_to_ptr.hbm [resolvable:$true] %s144
          %s146 = sshll.u32 %s138, 4
          %s147 = int_to_ptr.vmem [resolvable:$true] %s146
          %152 = dma.hbm_to_vmem [thread:$0]  %s145, 1280, %s147, %s135, 256, 128, 8
        $region24: #{tpu_custom_call.1} parent=19 // pred_fallthru
          _
      $region20: #{tpu_custom_call.1} parent=5 // pred_fallthru
        _
      %p153 = scmp.le.s32.totalorder 1, %s15
      %p154 = scmp.lt.s32.totalorder %s15, 3
      %p155 = pnand %p153, %p154
      %p156 = pneg %p155
      // Predicated region
      $region25: #{tpu_custom_call.1} parent=5 // pred_check
        _
      $region26: #{tpu_custom_call.1} parent=5 // pred_check_branch
        %158 = sbr.rel (%p155) target = $region28
      $region27: #{tpu_custom_call.1} parent=5 // pred_region
        %s159 = ssub.s32 %s15, 1
        // Predicated region
        $region29: #{tpu_custom_call.1} parent=27 // pred_check
          %p160 = pneg %p48
        $region30: #{tpu_custom_call.1} parent=27 // pred_check_branch
          %162 = sbr.rel (%p160) target = $region32
        $region31: #{tpu_custom_call.1} parent=27 // pred_region
          %164 = dma.done [#allocation5], 64
        $region32: #{tpu_custom_call.1} parent=27 // pred_fallthru
          _
        %s165 = sand.u32 %s63, 1
        %s166 = scalar_lea.sflag [#allocation3], %s165
        %s167 = sand.u32 %s63, 1
        %s168 = smul.addr %s167, 80
        %s169 = scalar_lea.vmem [#allocation6], %s168
        // Predicated region
        $region33: #{tpu_custom_call.1} parent=27 // pred_check
          %p170 = pneg %p76
        $region34: #{tpu_custom_call.1} parent=27 // pred_check_branch
          %172 = sbr.rel (%p170) target = $region36
        $region35: #{tpu_custom_call.1} parent=27 // pred_region
          %174 = dma.done %s166, 1280
        $region36: #{tpu_custom_call.1} parent=27 // pred_fallthru
          _
        %175 = sfence
        %p176 = pneg %p48
        %p177 = pneg %p45
        %s178 = sand.u32 %s63, 1
        %s179 = scalar_lea.sflag [#allocation3], %s178
        %s180 = sand.u32 %s63, 1
        %s181 = smul.addr %s180, 80
        %s182 = scalar_lea.vmem [#allocation6], %s181
        %p183 = pneg %p76
        %p184 = pneg %p73
        %p185 = pneg %p102
        %p186 = pneg %p99
        %s187 = sand.u32 %s89, 1
        %s188 = scalar_lea.sflag [#allocation4], %s187
        %s189 = sand.u32 %s89, 1
        %s190 = smul.addr %s189, 8
        %s191 = scalar_lea.vmem [#allocation7], %s190
        %s192 = sadd.s32 %s24, %s25
        %p193 = scmp.eq.s32.totalorder %s25, 0
        // Predicated region
        $region37: #{tpu_custom_call.1} parent=27 // pred_check
          %p194 = pneg %p193
        $region38: #{tpu_custom_call.1} parent=27 // pred_check_branch
          %196 = sbr.rel (%p194) target = $region40
        $region39: #{tpu_custom_call.1} parent=27 // pred_region
          %197 = vst [vmem:[%s191] sm:$0xff] 0.0
        $region40: #{tpu_custom_call.1} parent=27 // pred_fallthru
          _
        %s198 = sld [smem:[#allocation2]]
        %s199 = sld [smem:[#allocation2 + $0x1]]
        %s200 = sld [smem:[#allocation2 + $0x2]]
        %s201 = sld [smem:[#allocation2 + $0x3]]
        %s202 = sld [smem:[#allocation2 + $0x4]]
        %s203 = sld [smem:[#allocation2 + $0x5]]
        %s204 = sld [smem:[#allocation2 + $0x6]]
        %s205 = sld [smem:[#allocation2 + $0x7]]
        %s206 = sld [smem:[#allocation2 + $0x8]]
        %s207 = sld [smem:[#allocation2 + $0x80]]
        %s208 = sld [smem:[#allocation2 + $0x81]]
        %s209 = sld [smem:[#allocation2 + $0x82]]
        %s210 = sld [smem:[#allocation2 + $0x83]]
        %s211 = sld [smem:[#allocation2 + $0x84]]
        %s212 = sld [smem:[#allocation2 + $0x85]]
        %s213 = sld [smem:[#allocation2 + $0x86]]
        %s214 = sld [smem:[#allocation2 + $0x87]]
        %s215 = sld [smem:[#allocation2 + $0x88]]
        %s216 = sld [smem:[#allocation2 + $0x100]]
        %s217 = sld [smem:[#allocation2 + $0x101]]
        %s218 = sld [smem:[#allocation2 + $0x102]]
        %s219 = sld [smem:[#allocation2 + $0x103]]
        %s220 = sld [smem:[#allocation2 + $0x104]]
        %s221 = sld [smem:[#allocation2 + $0x105]]
        %s222 = sld [smem:[#allocation2 + $0x106]]
        %s223 = sld [smem:[#allocation2 + $0x107]]
        %s224 = sld [smem:[#allocation2 + $0x108]]
        %v225 = vld [vmem:[%s169] sm:$0xff]
        %s226 = scalar_lea.vmem %s169, 8 [#allocation6]
        %v227 = vld [vmem:[%s226] sm:$0xff]
        %s228 = scalar_lea.vmem %s169, 16 [#allocation6]
        %v229 = vld [vmem:[%s228] sm:$0xff]
        %s230 = scalar_lea.vmem %s169, 24 [#allocation6]
        %v231 = vld [vmem:[%s230] sm:$0xff]
        %s232 = scalar_lea.vmem %s169, 32 [#allocation6]
        %v233 = vld [vmem:[%s232] sm:$0xff]
        %s234 = scalar_lea.vmem %s169, 40 [#allocation6]
        %v235 = vld [vmem:[%s234] sm:$0xff]
        %s236 = scalar_lea.vmem %s169, 48 [#allocation6]
        %v237 = vld [vmem:[%s236] sm:$0xff]
        %s238 = scalar_lea.vmem %s169, 56 [#allocation6]
        %v239 = vld [vmem:[%s238] sm:$0xff]
        %s240 = scalar_lea.vmem %s169, 64 [#allocation6]
        %v241 = vld [vmem:[%s240] sm:$0xff]
        %s242 = scalar_lea.vmem %s169, 72 [#allocation6]
        %v243 = vld [vmem:[%s242] sm:$0xff]
        %vm244 = vcmp.eq.f32.partialorder %v243, 0.0
        %v245 = vsel %vm244, 1, 0
        %v246 = vcvt.s32.f32 %v245
        %vm247 = vcmp.eq.f32.partialorder %v243, 1.0
        %v248 = vsel %vm247, 1, 0
        %v249 = vcvt.s32.f32 %v248
        %vm250 = vcmp.eq.f32.partialorder %v243, 2.0
        %v251 = vsel %vm250, 1, 0
        %v252 = vcvt.s32.f32 %v251
        %v253 = vadd.f32 %v246, %v249
        %v254 = vadd.f32 %v253, %v252
        %v255 = vstv %s198
        %v256 = vmul.f32 %v246, %v255
        %v257 = vstv %s207
        %v258 = vmul.f32 %v249, %v257
        %v259 = vadd.f32 %v256, %v258
        %v260 = vstv %s216
        %v261 = vmul.f32 %v252, %v260
        %v262 = vadd.f32 %v259, %v261
        %v263 = vstv %s199
        %v264 = vmul.f32 %v246, %v263
        %v265 = vstv %s208
        %v266 = vmul.f32 %v249, %v265
        %v267 = vadd.f32 %v264, %v266
        %v268 = vstv %s217
        %v269 = vmul.f32 %v252, %v268
        %v270 = vadd.f32 %v267, %v269
        %v271 = vstv %s200
        %v272 = vmul.f32 %v246, %v271
        %v273 = vstv %s209
        %v274 = vmul.f32 %v249, %v273
        %v275 = vadd.f32 %v272, %v274
        %v276 = vstv %s218
        %v277 = vmul.f32 %v252, %v276
        %v278 = vadd.f32 %v275, %v277
        %v279 = vstv %s201
        %v280 = vmul.f32 %v246, %v279
        %v281 = vstv %s210
        %v282 = vmul.f32 %v249, %v281
        %v283 = vadd.f32 %v280, %v282
        %v284 = vstv %s219
        %v285 = vmul.f32 %v252, %v284
        %v286 = vadd.f32 %v283, %v285
        %v287 = vstv %s202
        %v288 = vmul.f32 %v246, %v287
        %v289 = vstv %s211
        %v290 = vmul.f32 %v249, %v289
        %v291 = vadd.f32 %v288, %v290
        %v292 = vstv %s220
        %v293 = vmul.f32 %v252, %v292
        %v294 = vadd.f32 %v291, %v293
        %v295 = vstv %s203
        %v296 = vmul.f32 %v246, %v295
        %v297 = vstv %s212
        %v298 = vmul.f32 %v249, %v297
        %v299 = vadd.f32 %v296, %v298
        %v300 = vstv %s221
        %v301 = vmul.f32 %v252, %v300
        %v302 = vadd.f32 %v299, %v301
        %v303 = vstv %s204
        %v304 = vmul.f32 %v246, %v303
        %v305 = vstv %s213
        %v306 = vmul.f32 %v249, %v305
        %v307 = vadd.f32 %v304, %v306
        %v308 = vstv %s222
        %v309 = vmul.f32 %v252, %v308
        %v310 = vadd.f32 %v307, %v309
        %v311 = vstv %s205
        %v312 = vmul.f32 %v246, %v311
        %v313 = vstv %s214
        %v314 = vmul.f32 %v249, %v313
        %v315 = vadd.f32 %v312, %v314
        %v316 = vstv %s223
        %v317 = vmul.f32 %v252, %v316
        %v318 = vadd.f32 %v315, %v317
        %v319 = vstv %s206
        %v320 = vmul.f32 %v246, %v319
        %v321 = vstv %s215
        %v322 = vmul.f32 %v249, %v321
        %v323 = vadd.f32 %v320, %v322
        %v324 = vstv %s224
        %v325 = vmul.f32 %v252, %v324
        %v326 = vadd.f32 %v323, %v325
        %v327 = vfloor.f32 %v225
        %v328 = vsub.f32 %v225, %v327
        %v329 = vfloor.f32 %v227
        %v330 = vsub.f32 %v227, %v329
        %v331 = vfloor.f32 %v229
        %v332 = vsub.f32 %v229, %v331
        %v333 = vfloor.f32 %v231
        %v334 = vsub.f32 %v231, %v333
        %v335 = vfloor.f32 %v233
        %v336 = vsub.f32 %v233, %v335
        %v337 = vfloor.f32 %v235
        %v338 = vsub.f32 %v235, %v337
        %v339 = vsub.f32 %v334, %v328
        %v340 = vsub.f32 %v336, %v330
        %v341 = vsub.f32 %v338, %v332
        %v342 = vadd.f32 %v237, %v339
        %v343 = vadd.f32 %v239, %v340
        %v344 = vadd.f32 %v241, %v341
        %v345 = vmul.f32 %v262, %v339
        %v346 = vmul.f32 %v270, %v340
        %v347 = vadd.f32 %v345, %v346
        %v348 = vmul.f32 %v278, %v341
        %v349 = vadd.f32 %v347, %v348
        %v350 = vmul.f32 %v286, %v339
        %v351 = vmul.f32 %v294, %v340
        %v352 = vadd.f32 %v350, %v351
        %v353 = vmul.f32 %v302, %v341
        %v354 = vadd.f32 %v352, %v353
        %v355 = vmul.f32 %v310, %v339
        %v356 = vmul.f32 %v318, %v340
        %v357 = vadd.f32 %v355, %v356
        %v358 = vmul.f32 %v326, %v341
        %v359 = vadd.f32 %v357, %v358
        %v360 = vadd.f32 %v349, %v262
        %v361 = vadd.f32 %v360, %v270
        %v362 = vadd.f32 %v361, %v278
        %v363 = vmul.f32 %v362, %v362
        %v364 = vadd.f32 %v354, %v286
        %v365 = vadd.f32 %v364, %v294
        %v366 = vadd.f32 %v365, %v302
        %v367 = vmul.f32 %v366, %v366
        %v368 = vadd.f32 %v363, %v367
        %v369 = vadd.f32 %v359, %v310
        %v370 = vadd.f32 %v369, %v318
        %v371 = vadd.f32 %v370, %v326
        %v372 = vmul.f32 %v371, %v371
        %v373 = vadd.f32 %v368, %v372
        %v374 = vmul.f32 %v361, %v361
        %v375 = vmul.f32 %v365, %v365
        %v376 = vadd.f32 %v374, %v375
        %v377 = vmul.f32 %v370, %v370
        %v378 = vadd.f32 %v376, %v377
        %vm379 = vcmp.lt.f32.partialorder %v378, %v373
        %v380 = vsel %vm379, %v378, %v373
        %v381 = vsel %vm379, 0.0, -1.0
        %v382 = vsub.f32 %v361, %v278
        %v383 = vmul.f32 %v382, %v382
        %v384 = vsub.f32 %v365, %v302
        %v385 = vmul.f32 %v384, %v384
        %v386 = vadd.f32 %v383, %v385
        %v387 = vsub.f32 %v370, %v326
        %v388 = vmul.f32 %v387, %v387
        %v389 = vadd.f32 %v386, %v388
        %vm390 = vcmp.lt.f32.partialorder %v389, %v380
        %v391 = vsel %vm390, %v389, %v380
        %v392 = vsel %vm390, 1.0, %v381
        %v393 = vadd.f32 %v360, %v278
        %v394 = vmul.f32 %v393, %v393
        %v395 = vadd.f32 %v364, %v302
        %v396 = vmul.f32 %v395, %v395
        %v397 = vadd.f32 %v394, %v396
        %v398 = vadd.f32 %v369, %v326
        %v399 = vmul.f32 %v398, %v398
        %v400 = vadd.f32 %v397, %v399
        %vm401 = vcmp.lt.f32.partialorder %v400, %v391
        %v402 = vsel %vm401, %v400, %v391
        %v403 = vsel %vm401, 0.0, -1.0
        %v404 = vsel %vm401, -1.0, %v392
        %v405 = vmul.f32 %v360, %v360
        %v406 = vmul.f32 %v364, %v364
        %v407 = vadd.f32 %v405, %v406
        %v408 = vmul.f32 %v369, %v369
        %v409 = vadd.f32 %v407, %v408
        %vm410 = vcmp.lt.f32.partialorder %v409, %v402
        %v411 = vsel %vm410, %v409, %v402
        %v412 = vsel %vm410, 0.0, %v403
        %v413 = vsel %vm410, 0.0, %v404
        %v414 = vsub.f32 %v360, %v278
        %v415 = vmul.f32 %v414, %v414
        %v416 = vsub.f32 %v364, %v302
        %v417 = vmul.f32 %v416, %v416
        %v418 = vadd.f32 %v415, %v417
        %v419 = vsub.f32 %v369, %v326
        %v420 = vmul.f32 %v419, %v419
        %v421 = vadd.f32 %v418, %v420
        %vm422 = vcmp.lt.f32.partialorder %v421, %v411
        %v423 = vsel %vm422, %v421, %v411
        %v424 = vsel %vm422, 0.0, %v412
        %v425 = vsel %vm422, 1.0, %v413
        %v426 = vsub.f32 %v360, %v270
        %v427 = vadd.f32 %v426, %v278
        %v428 = vmul.f32 %v427, %v427
        %v429 = vsub.f32 %v364, %v294
        %v430 = vadd.f32 %v429, %v302
        %v431 = vmul.f32 %v430, %v430
        %v432 = vadd.f32 %v428, %v431
        %v433 = vsub.f32 %v369, %v318
        %v434 = vadd.f32 %v433, %v326
        %v435 = vmul.f32 %v434, %v434
        %v436 = vadd.f32 %v432, %v435
        %vm437 = vcmp.lt.f32.partialorder %v436, %v423
        %v438 = vsel %vm437, %v436, %v423
        %v439 = vsel %vm437, 1.0, %v424
        %v440 = vsel %vm437, -1.0, %v425
        %v441 = vmul.f32 %v426, %v426
        %v442 = vmul.f32 %v429, %v429
        %v443 = vadd.f32 %v441, %v442
        %v444 = vmul.f32 %v433, %v433
        %v445 = vadd.f32 %v443, %v444
        %vm446 = vcmp.lt.f32.partialorder %v445, %v438
        %v447 = vsel %vm446, %v445, %v438
        %v448 = vsel %vm446, 1.0, %v439
        %v449 = vsel %vm446, 0.0, %v440
        %v450 = vsub.f32 %v426, %v278
        %v451 = vmul.f32 %v450, %v450
        %v452 = vsub.f32 %v429, %v302
        %v453 = vmul.f32 %v452, %v452
        %v454 = vadd.f32 %v451, %v453
        %v455 = vsub.f32 %v433, %v326
        %v456 = vmul.f32 %v455, %v455
        %v457 = vadd.f32 %v454, %v456
        %vm458 = vcmp.lt.f32.partialorder %v457, %v447
        %v459 = vsel %vm458, %v457, %v447
        %v460 = vsel %vm458, 1.0, %v448
        %v461 = vsel %vm458, 1.0, %v449
        %v462 = vadd.f32 %v349, %v270
        %v463 = vadd.f32 %v462, %v278
        %v464 = vmul.f32 %v463, %v463
        %v465 = vadd.f32 %v354, %v294
        %v466 = vadd.f32 %v465, %v302
        %v467 = vmul.f32 %v466, %v466
        %v468 = vadd.f32 %v464, %v467
        %v469 = vadd.f32 %v359, %v318
        %v470 = vadd.f32 %v469, %v326
        %v471 = vmul.f32 %v470, %v470
        %v472 = vadd.f32 %v468, %v471
        %vm473 = vcmp.lt.f32.partialorder %v472, %v459
        %v474 = vsel %vm473, %v472, %v459
        %v475 = vsel %vm473, 0.0, -1.0
        %v476 = vsel %vm473, -1.0, %v460
        %v477 = vsel %vm473, -1.0, %v461
        %v478 = vmul.f32 %v462, %v462
        %v479 = vmul.f32 %v465, %v465
        %v480 = vadd.f32 %v478, %v479
        %v481 = vmul.f32 %v469, %v469
        %v482 = vadd.f32 %v480, %v481
        %vm483 = vcmp.lt.f32.partialorder %v482, %v474
        %v484 = vsel %vm483, %v482, %v474
        %v485 = vsel %vm483, 0.0, %v475
        %v486 = vsel %vm483, -1.0, %v476
        %v487 = vsel %vm483, 0.0, %v477
        %v488 = vsub.f32 %v462, %v278
        %v489 = vmul.f32 %v488, %v488
        %v490 = vsub.f32 %v465, %v302
        %v491 = vmul.f32 %v490, %v490
        %v492 = vadd.f32 %v489, %v491
        %v493 = vsub.f32 %v469, %v326
        %v494 = vmul.f32 %v493, %v493
        %v495 = vadd.f32 %v492, %v494
        %vm496 = vcmp.lt.f32.partialorder %v495, %v484
        %v497 = vsel %vm496, %v495, %v484
        %v498 = vsel %vm496, 0.0, %v485
        %v499 = vsel %vm496, -1.0, %v486
        %v500 = vsel %vm496, 1.0, %v487
        %v501 = vadd.f32 %v349, %v278
        %v502 = vmul.f32 %v501, %v501
        %v503 = vadd.f32 %v354, %v302
        %v504 = vmul.f32 %v503, %v503
        %v505 = vadd.f32 %v502, %v504
        %v506 = vadd.f32 %v359, %v326
        %v507 = vmul.f32 %v506, %v506
        %v508 = vadd.f32 %v505, %v507
        %vm509 = vcmp.lt.f32.partialorder %v508, %v497
        %v510 = vsel %vm509, %v508, %v497
        %v511 = vsel %vm509, 0.0, %v498
        %v512 = vsel %vm509, 0.0, %v499
        %v513 = vsel %vm509, -1.0, %v500
        %v514 = vmul.f32 %v349, %v349
        %v515 = vmul.f32 %v354, %v354
        %v516 = vadd.f32 %v514, %v515
        %v517 = vmul.f32 %v359, %v359
        %v518 = vadd.f32 %v516, %v517
        %vm519 = vcmp.lt.f32.partialorder %v518, %v510
        %v520 = vsel %vm519, %v518, %v510
        %v521 = vsel %vm519, 0.0, %v511
        %v522 = vsel %vm519, 0.0, %v512
        %v523 = vsel %vm519, 0.0, %v513
        %v524 = vsub.f32 %v349, %v278
        %v525 = vmul.f32 %v524, %v524
        %v526 = vsub.f32 %v354, %v302
        %v527 = vmul.f32 %v526, %v526
        %v528 = vadd.f32 %v525, %v527
        %v529 = vsub.f32 %v359, %v326
        %v530 = vmul.f32 %v529, %v529
        %v531 = vadd.f32 %v528, %v530
        %vm532 = vcmp.lt.f32.partialorder %v531, %v520
        %v533 = vsel %vm532, %v531, %v520
        %v534 = vsel %vm532, 0.0, %v521
        %v535 = vsel %vm532, 0.0, %v522
        %v536 = vsel %vm532, 1.0, %v523
        %v537 = vsub.f32 %v349, %v270
        %v538 = vadd.f32 %v537, %v278
        %v539 = vmul.f32 %v538, %v538
        %v540 = vsub.f32 %v354, %v294
        %v541 = vadd.f32 %v540, %v302
        %v542 = vmul.f32 %v541, %v541
        %v543 = vadd.f32 %v539, %v542
        %v544 = vsub.f32 %v359, %v318
        %v545 = vadd.f32 %v544, %v326
        %v546 = vmul.f32 %v545, %v545
        %v547 = vadd.f32 %v543, %v546
        %vm548 = vcmp.lt.f32.partialorder %v547, %v533
        %v549 = vsel %vm548, %v547, %v533
        %v550 = vsel %vm548, 0.0, %v534
        %v551 = vsel %vm548, 1.0, %v535
        %v552 = vsel %vm548, -1.0, %v536
        %v553 = vmul.f32 %v537, %v537
        %v554 = vmul.f32 %v540, %v540
        %v555 = vadd.f32 %v553, %v554
        %v556 = vmul.f32 %v544, %v544
        %v557 = vadd.f32 %v555, %v556
        %vm558 = vcmp.lt.f32.partialorder %v557, %v549
        %v559 = vsel %vm558, %v557, %v549
        %v560 = vsel %vm558, 0.0, %v550
        %v561 = vsel %vm558, 1.0, %v551
        %v562 = vsel %vm558, 0.0, %v552
        %v563 = vsub.f32 %v537, %v278
        %v564 = vmul.f32 %v563, %v563
        %v565 = vsub.f32 %v540, %v302
        %v566 = vmul.f32 %v565, %v565
        %v567 = vadd.f32 %v564, %v566
        %v568 = vsub.f32 %v544, %v326
        %v569 = vmul.f32 %v568, %v568
        %v570 = vadd.f32 %v567, %v569
        %vm571 = vcmp.lt.f32.partialorder %v570, %v559
        %v572 = vsel %vm571, %v570, %v559
        %v573 = vsel %vm571, 0.0, %v560
        %v574 = vsel %vm571, 1.0, %v561
        %v575 = vsel %vm571, 1.0, %v562
        %v576 = vsub.f32 %v349, %v262
        %v577 = vadd.f32 %v576, %v270
        %v578 = vadd.f32 %v577, %v278
        %v579 = vmul.f32 %v578, %v578
        %v580 = vsub.f32 %v354, %v286
        %v581 = vadd.f32 %v580, %v294
        %v582 = vadd.f32 %v581, %v302
        %v583 = vmul.f32 %v582, %v582
        %v584 = vadd.f32 %v579, %v583
        %v585 = vsub.f32 %v359, %v310
        %v586 = vadd.f32 %v585, %v318
        %v587 = vadd.f32 %v586, %v326
        %v588 = vmul.f32 %v587, %v587
        %v589 = vadd.f32 %v584, %v588
        %vm590 = vcmp.lt.f32.partialorder %v589, %v572
        %v591 = vsel %vm590, %v589, %v572
        %v592 = vsel %vm590, 1.0, %v573
        %v593 = vsel %vm590, -1.0, %v574
        %v594 = vsel %vm590, -1.0, %v575
        %v595 = vmul.f32 %v577, %v577
        %v596 = vmul.f32 %v581, %v581
        %v597 = vadd.f32 %v595, %v596
        %v598 = vmul.f32 %v586, %v586
        %v599 = vadd.f32 %v597, %v598
        %vm600 = vcmp.lt.f32.partialorder %v599, %v591
        %v601 = vsel %vm600, %v599, %v591
        %v602 = vsel %vm600, 1.0, %v592
        %v603 = vsel %vm600, -1.0, %v593
        %v604 = vsel %vm600, 0.0, %v594
        %v605 = vsub.f32 %v577, %v278
        %v606 = vmul.f32 %v605, %v605
        %v607 = vsub.f32 %v581, %v302
        %v608 = vmul.f32 %v607, %v607
        %v609 = vadd.f32 %v606, %v608
        %v610 = vsub.f32 %v586, %v326
        %v611 = vmul.f32 %v610, %v610
        %v612 = vadd.f32 %v609, %v611
        %vm613 = vcmp.lt.f32.partialorder %v612, %v601
        %v614 = vsel %vm613, %v612, %v601
        %v615 = vsel %vm613, 1.0, %v602
        %v616 = vsel %vm613, -1.0, %v603
        %v617 = vsel %vm613, 1.0, %v604
        %v618 = vadd.f32 %v576, %v278
        %v619 = vmul.f32 %v618, %v618
        %v620 = vadd.f32 %v580, %v302
        %v621 = vmul.f32 %v620, %v620
        %v622 = vadd.f32 %v619, %v621
        %v623 = vadd.f32 %v585, %v326
        %v624 = vmul.f32 %v623, %v623
        %v625 = vadd.f32 %v622, %v624
        %vm626 = vcmp.lt.f32.partialorder %v625, %v614
        %v627 = vsel %vm626, %v625, %v614
        %v628 = vsel %vm626, 1.0, %v615
        %v629 = vsel %vm626, 0.0, %v616
        %v630 = vsel %vm626, -1.0, %v617
        %v631 = vmul.f32 %v576, %v576
        %v632 = vmul.f32 %v580, %v580
        %v633 = vadd.f32 %v631, %v632
        %v634 = vmul.f32 %v585, %v585
        %v635 = vadd.f32 %v633, %v634
        %vm636 = vcmp.lt.f32.partialorder %v635, %v627
        %v637 = vsel %vm636, %v635, %v627
        %v638 = vsel %vm636, 1.0, %v628
        %v639 = vsel %vm636, 0.0, %v629
        %v640 = vsel %vm636, 0.0, %v630
        %v641 = vsub.f32 %v576, %v278
        %v642 = vmul.f32 %v641, %v641
        %v643 = vsub.f32 %v580, %v302
        %v644 = vmul.f32 %v643, %v643
        %v645 = vadd.f32 %v642, %v644
        %v646 = vsub.f32 %v585, %v326
        %v647 = vmul.f32 %v646, %v646
        %v648 = vadd.f32 %v645, %v647
        %vm649 = vcmp.lt.f32.partialorder %v648, %v637
        %v650 = vsel %vm649, %v648, %v637
        %v651 = vsel %vm649, 1.0, %v638
        %v652 = vsel %vm649, 0.0, %v639
        %v653 = vsel %vm649, 1.0, %v640
        %v654 = vsub.f32 %v576, %v270
        %v655 = vadd.f32 %v654, %v278
        %v656 = vmul.f32 %v655, %v655
        %v657 = vsub.f32 %v580, %v294
        %v658 = vadd.f32 %v657, %v302
        %v659 = vmul.f32 %v658, %v658
        %v660 = vadd.f32 %v656, %v659
        %v661 = vsub.f32 %v585, %v318
        %v662 = vadd.f32 %v661, %v326
        %v663 = vmul.f32 %v662, %v662
        %v664 = vadd.f32 %v660, %v663
        %vm665 = vcmp.lt.f32.partialorder %v664, %v650
        %v666 = vsel %vm665, %v664, %v650
        %v667 = vsel %vm665, 1.0, %v651
        %v668 = vsel %vm665, 1.0, %v652
        %v669 = vsel %vm665, -1.0, %v653
        %v670 = vmul.f32 %v654, %v654
        %v671 = vmul.f32 %v657, %v657
        %v672 = vadd.f32 %v670, %v671
        %v673 = vmul.f32 %v661, %v661
        %v674 = vadd.f32 %v672, %v673
        %vm675 = vcmp.lt.f32.partialorder %v674, %v666
        %v676 = vsel %vm675, %v674, %v666
        %v677 = vsel %vm675, 1.0, %v667
        %v678 = vsel %vm675, 1.0, %v668
        %v679 = vsel %vm675, 0.0, %v669
        %v680 = vsub.f32 %v654, %v278
        %v681 = vmul.f32 %v680, %v680
        %v682 = vsub.f32 %v657, %v302
        %v683 = vmul.f32 %v682, %v682
        %v684 = vadd.f32 %v681, %v683
        %v685 = vsub.f32 %v661, %v326
        %v686 = vmul.f32 %v685, %v685
        %v687 = vadd.f32 %v684, %v686
        %vm688 = vcmp.lt.f32.partialorder %v687, %v676
        %v689 = vsel %vm688, 1.0, %v677
        %v690 = vsel %vm688, 1.0, %v678
        %v691 = vsel %vm688, 1.0, %v679
        %v692 = vsub.f32 %v342, %v689
        %v693 = vsub.f32 %v343, %v690
        %v694 = vsub.f32 %v344, %v691
        %v695 = vand.u32 2147483647, %v692
        %v696 = vand.u32 2147483647, %v693
        %v697 = vand.u32 2147483647, %v694
        %v698 = vadd.f32 %v695, %v696
        %v699 = vadd.f32 %v698, %v697
        %v700 = vmul.f32 %v699, %v254
        %v701 = vadd.f32 %v700, 0.0
        %v702 = vld [vmem:[%s191] sm:$0xff]
        %v703 = vadd.f32 %v702, %v701
        %704 = vst [vmem:[%s191] sm:$0xff] %v703
        %s705 = sand.u32 %s89, 1
        %s706 = scalar_lea.sflag [#allocation4], %s705
        %s707 = sand.u32 %s89, 1
        %s708 = smul.addr %s707, 8
        %s709 = scalar_lea.vmem [#allocation7], %s708
        // Predicated region
        $region41: #{tpu_custom_call.1} parent=27 // pred_check
          %p710 = pneg %p99
        $region42: #{tpu_custom_call.1} parent=27 // pred_check_branch
          %712 = sbr.rel (%p710) target = $region44
        $region43: #{tpu_custom_call.1} parent=27 // pred_region
          %714 = vsyncadd %s706, 0
          %s715 = smul.addr %s24, 8
          %s716 = scalar_lea.hbm %s2, %s715
          %s718 = sshll.u32 %s709, 4
          %s719 = int_to_ptr.vmem [resolvable:$true] %s718
          %s720 = sshll.u32 %s716, 4
          %s721 = int_to_ptr.hbm [resolvable:$true] %s720
          %723 = dma.vmem_to_hbm [thread:$0]  %s719, 128, %s721, %s706
        $region44: #{tpu_custom_call.1} parent=27 // pred_fallthru
          _
      $region28: #{tpu_custom_call.1} parent=5 // pred_fallthru
        _
      %p724 = scmp.le.s32.totalorder 2, %s15
      // Predicated region
      $region45: #{tpu_custom_call.1} parent=5 // pred_check
        %p725 = pneg %p724
      $region46: #{tpu_custom_call.1} parent=5 // pred_check_branch
        %727 = sbr.rel (%p725) target = $region48
      $region47: #{tpu_custom_call.1} parent=5 // pred_region
        %s728 = ssub.s32 %s15, 2
        // Predicated region
        $region49: #{tpu_custom_call.1} parent=47 // pred_check
          %p729 = pneg %p105
        $region50: #{tpu_custom_call.1} parent=47 // pred_check_branch
          %731 = sbr.rel (%p729) target = $region52
        $region51: #{tpu_custom_call.1} parent=47 // pred_region
          %s732 = sand.u32 %s90, 1
          %s733 = scalar_lea.sflag [#allocation4], %s732
          %s734 = sand.u32 %s90, 1
          %s735 = smul.addr %s734, 8
          %s736 = scalar_lea.vmem [#allocation7], %s735
          %738 = dma.done %s733, 128
        $region52: #{tpu_custom_call.1} parent=47 // pred_fallthru
          _
      $region48: #{tpu_custom_call.1} parent=5 // pred_fallthru
        _
    $region6: #{tpu_custom_call.1} parent=1 // loop_footer
      %s19 = sadd.s32 1, %s15
    $region7: #{tpu_custom_call.1} parent=1 // loop_footer_branch
      %14 = sbr.rel target = $region3
    $region8: #{tpu_custom_call.1} parent=1 // loop_exit
      _
    %739 = vsyncpa [#allocation3], 1
    %s740 = scalar_lea.sflag [#allocation3], 1
    %741 = vsyncpa %s740, 1
    %742 = vsyncpa [#allocation4], 1
    %s743 = scalar_lea.sflag [#allocation4], 1
    %744 = vsyncpa %s743, 1
    %745 = vsyncpa [#allocation5], 1
    %s746 = scalar_lea.sflag [#allocation5], 1
    %747 = vsyncpa %s746, 1

</llo_original>
